<compile_context>
chip_gen: v6e
topology: v6e:2x2x1
jax: 0.10.0
libtpu: 0.0.40
codegen_flags: <defaults>
</compile_context>

<pallas_src>
import functools

import jax
import jax.numpy as jnp
from jax.experimental import pallas as pl
from jax.experimental.pallas import tpu as pltpu


_VMEM_LIMIT = 48 * 1024 * 1024


def _round_up(x, m):
    return (x + m - 1) // m * m


# ---------------------------------------------------------------------------
# fused 3x3x3 conv (pad=1) + folded BatchNorm + ReLU
# ---------------------------------------------------------------------------
def _conv3d_kernel(x0, x1, x2, w_ref, s_ref, b_ref, o_ref, *, wp, n_out, relu):
    """One output depth slice.

    x0/x1/x2 : (1, Cin, n_in)   three padded input depth slices, H*W flattened
    w_ref    : (9, Cout, 3*Cin) taps packed as [kd*3+kh, cout, kw*Cin+cin]
    s_ref    : (Cout, 1)        folded BatchNorm scale
    b_ref    : (Cout, 1)        folded BatchNorm shift
    o_ref    : (1, Cout, n_out) output slice (columns >= W are wrap garbage,
                                the wrapper slices them off)
    """
    xs = (x0, x1, x2)
    acc = None
    for kd in range(3):
        for kh in range(3):
            base = kh * wp
            # Pack the three kw taps along the contraction dim -> (3*Cin, n_out)
            rhs = jnp.concatenate(
                [xs[kd][0, :, pl.ds(base + kw, n_out)] for kw in range(3)],
                axis=0)
            part = jnp.dot(w_ref[kd * 3 + kh], rhs,
                           preferred_element_type=jnp.float32)
            acc = part if acc is None else acc + part
    # folded inference-mode BatchNorm + ReLU epilogue (scale/shift read once)
    y = acc * s_ref[...] + b_ref[...]
    if relu:
        y = jnp.maximum(y, 0.0)
    o_ref[0] = y.astype(o_ref.dtype)


def _conv3d_core(xp, w, scale, shift, *, depth_stride=1, relu=True):
    """3x3x3 conv on an already spatially padded input.

    xp: (Dp, Cin, Hp, Wp); w: (9, Cout, 3*Cin); scale/shift: (Cout, 1).
    Returns (Do, Cout, Hp-2, Wp-2) with Do = (Dp-3)//depth_stride + 1.
    H/W are evaluated at stride 1 (callers subsample for stride 2).
    """
    dp, cin, hp, wp = xp.shape
    cout = w.shape[1]
    ho = hp - 2
    do = (dp - 3) // depth_stride + 1
    n_out = ho * wp
    n_in = _round_up(hp * wp + 2, 128)          # +2 covers the largest tap offset
    x_flat = jnp.pad(xp.reshape(dp, cin, hp * wp),
                     ((0, 0), (0, 0), (0, n_in - hp * wp)))

    kernel = functools.partial(_conv3d_kernel, wp=wp, n_out=n_out, relu=relu)
    in_specs = [
        pl.BlockSpec((1, cin, n_in),
                     lambda d, kd=kd, s=depth_stride: (s * d + kd, 0, 0))
        for kd in range(3)
    ] + [
        pl.BlockSpec((9, cout, 3 * cin), lambda d: (0, 0, 0)),   # resident weights
        pl.BlockSpec((cout, 1), lambda d: (0, 0)),
        pl.BlockSpec((cout, 1), lambda d: (0, 0)),
    ]
    out_flat = pl.pallas_call(
        kernel,
        out_shape=jax.ShapeDtypeStruct((do, cout, n_out), jnp.float32),
        grid=(do,),
        in_specs=in_specs,
        out_specs=pl.BlockSpec((1, cout, n_out), lambda d: (d, 0, 0)),
        compiler_params=pltpu.CompilerParams(
            dimension_semantics=("parallel",),
            vmem_limit_bytes=_VMEM_LIMIT,
        ),
        cost_estimate=pl.CostEstimate(
            flops=2 * do * n_out * cout * 27 * cin,
            transcendentals=0,
            bytes_accessed=4 * (3 * do * cin * n_in + do * cout * n_out
                                + 27 * cout * cin),
        ),
    )(x_flat, x_flat, x_flat, w, scale, shift)
    # un-flatten and drop the wrap-around garbage columns
    return out_flat.reshape(do, cout, ho, wp)[:, :, :, : wp - 2]


def conv3d_bn_relu(x, w, scale, shift, *, stride=1, relu=True):
    """ConvBnReLU3D: Conv3d(k=3, pad=1, stride, bias=False) + folded BN + ReLU.

    x: (D, Cin, H, W) -> (Do, Cout, Ho, Wo)."""
    xp = jnp.pad(x, ((1, 1), (0, 0), (1, 1), (1, 1)))
    out = _conv3d_core(xp, w, scale, shift, depth_stride=stride, relu=relu)
    if stride == 2:
        # TODO(synk): H/W stride-2 is realised by subsampling the stride-1 plane
        # (depth stride is exact); a strided-output kernel would avoid the ~4x
        # extra in-plane work on the four strided layers.
        out = out[:, :, ::2, ::2]
    return out


def conv_transpose3d_bn_relu_s2(x, w, scale, shift):
    """ConvTranspose3d(k=3, stride=2, padding=1, output_padding=1, bias=False)
    + folded BN + ReLU, as zero-dilation + pad + direct conv.  `w` is the
    equivalent direct-conv weight (transpose-conv weight spatially flipped with
    in/out channels swapped), packed as (9, Cout, 3*Cin)."""
    d, c, h, wdim = x.shape
    dil = jnp.zeros((2 * d - 1, c, 2 * h - 1, 2 * wdim - 1), x.dtype)
    dil = dil.at[::2, :, ::2, ::2].set(x)
    xp = jnp.pad(dil, ((1, 2), (0, 0), (1, 2), (1, 2)))
    # TODO(synk): the zero-dilated conv wastes ~8x multiplies on zeros; a
    # sub-pixel (parity-decomposed) kernel would avoid it.
    return _conv3d_core(xp, w, scale, shift, depth_stride=1, relu=True)


# ---------------------------------------------------------------------------
# MaxPool3d(kernel=3, stride=2), no padding
# ---------------------------------------------------------------------------
def _maxpool3d_kernel(x0, x1, x2, o_ref, *, w, n_out):
    xs = (x0, x1, x2)
    acc = None
    for kd in range(3):
        for kh in range(3):
            for kw in range(3):
                t = xs[kd][0, :, pl.ds(kh * w + kw, n_out)]
                acc = t if acc is None else jnp.maximum(acc, t)
    o_ref[0] = acc


def maxpool3d_k3_s2(x):
    """nn.MaxPool3d(3, stride=2).  x: (D, C, H, W)."""
    d, c, h, w = x.shape
    do = (d - 3) // 2 + 1
    ho_full = h - 2                       # stride-1 rows, subsampled below
    n_out = ho_full * w
    n_in = _round_up(h * w + 2, 128)
    x_flat = jnp.pad(x.reshape(d, c, h * w), ((0, 0), (0, 0), (0, n_in - h * w)))
    kernel = functools.partial(_maxpool3d_kernel, w=w, n_out=n_out)
    out = pl.pallas_call(
        kernel,
        out_shape=jax.ShapeDtypeStruct((do, c, n_out), x.dtype),
        grid=(do,),
        in_specs=[pl.BlockSpec((1, c, n_in), lambda dd, kd=kd: (2 * dd + kd, 0, 0))
                  for kd in range(3)],
        out_specs=pl.BlockSpec((1, c, n_out), lambda dd: (dd, 0, 0)),
        compiler_params=pltpu.CompilerParams(
            dimension_semantics=("parallel",),
            vmem_limit_bytes=_VMEM_LIMIT,
        ),
    )(x_flat, x_flat, x_flat)
    return out.reshape(do, c, ho_full, w)[:, :, 0:h - 2:2, 0:w - 2:2]


# ---------------------------------------------------------------------------
# SceneNet parameters + forward
# ---------------------------------------------------------------------------
def _init_conv(key, cin, cout):
    """Random conv weights (packed (9, Cout, 3*Cin)) + folded inference BN."""
    k1, k2, k3 = jax.random.split(key, 3)
    std = (2.0 / (27.0 * cin)) ** 0.5
    w = std * jax.random.normal(k1, (9, cout, 3 * cin), jnp.float32)
    gamma = 1.0 + 0.1 * jax.random.normal(k2, (cout, 1), jnp.float32)
    beta = 0.1 * jax.random.normal(k3, (cout, 1), jnp.float32)
    running_mean = jnp.zeros((cout, 1), jnp.float32)
    running_var = jnp.ones((cout, 1), jnp.float32)
    # TODO(synk): BatchNorm3d is folded in inference mode (running stats);
    # training-mode batch statistics are not computed here.
    scale = gamma / jnp.sqrt(running_var + 1e-5)
    shift = beta - running_mean * scale
    return w, scale, shift


def init_scenenet_params(key):
    ks = jax.random.split(key, 11)
    return {
        "conv0":  _init_conv(ks[0], 1, 16),
        "conv0a": _init_conv(ks[1], 16, 16),
        "conv1":  _init_conv(ks[2], 16, 32),
        "conv2":  _init_conv(ks[3], 32, 32),
        "conv2a": _init_conv(ks[4], 32, 32),
        "conv4":  _init_conv(ks[5], 32, 64),
        # conv5 / conv6 are ConvTranspose3d layers; stored as the equivalent
        # direct-conv weights (spatially flipped, in/out channels swapped).
        "conv5":  _init_conv(ks[6], 64, 32),
        "conv6":  _init_conv(ks[7], 32, 16),
        "conv7":  _init_conv(ks[8], 16, 32),
        "conv8":  _init_conv(ks[9], 32, 64),
        "conv9":  _init_conv(ks[10], 64, 128),
    }


@jax.jit
def scenenet_forward(params, x):
    """x: (1, 1, D, H, W) float32 voxel grid (batch size 1)."""
    a = jnp.transpose(x[0], (1, 0, 2, 3))                       # (D, C=1, H, W)
    conv0 = conv3d_bn_relu(a, *params["conv0"])
    conv0 = conv3d_bn_relu(conv0, *params["conv0a"])
    t = conv3d_bn_relu(conv0, *params["conv1"], stride=2)
    t = conv3d_bn_relu(t, *params["conv2"])
    conv2 = conv3d_bn_relu(t, *params["conv2a"])
    conv4 = conv3d_bn_relu(conv2, *params["conv4"])
    # stride-1 ConvTranspose3d == direct conv (with transformed weights)
    conv5 = conv2 + conv3d_bn_relu(conv4, *params["conv5"])
    conv6 = conv0 + conv_transpose3d_bn_relu_s2(conv5, *params["conv6"])
    t = maxpool3d_k3_s2(conv3d_bn_relu(conv6, *params["conv7"], stride=2))
    t = maxpool3d_k3_s2(conv3d_bn_relu(t, *params["conv8"], stride=2))
    t = maxpool3d_k3_s2(conv3d_bn_relu(t, *params["conv9"], stride=2))
    return jnp.squeeze(t)                                       # (128,)


# ---------------------------------------------------------------------------
# pure-JAX references (for small-shape correctness checks)
# ---------------------------------------------------------------------------
def _w_packed_to_oidhw(w_packed, cin, cout):
    return w_packed.reshape(3, 3, cout, 3, cin).transpose(2, 4, 0, 1, 3)


def _ref_conv3d_bn_relu(x, w_packed, scale, shift, *, stride=1):
    d, cin, h, wdim = x.shape
    cout = w_packed.shape[1]
    w_oidhw = _w_packed_to_oidhw(w_packed, cin, cout)
    lhs = jnp.transpose(x, (1, 0, 2, 3))[None]                  # (1, Cin, D, H, W)
    y = jax.lax.conv_general_dilated(
        lhs, w_oidhw, (stride,) * 3, [(1, 1)] * 3,
        dimension_numbers=("NCDHW", "OIDHW", "NCDHW"),
        precision=jax.lax.Precision.HIGHEST)[0]
    y = y * scale.reshape(cout, 1, 1, 1) + shift.reshape(cout, 1, 1, 1)
    return jnp.transpose(jnp.maximum(y, 0.0), (1, 0, 2, 3))


def _ref_deconv_s2_bn_relu(x, w_packed, scale, shift):
    d, cin, h, wdim = x.shape
    cout = w_packed.shape[1]
    w_oidhw = _w_packed_to_oidhw(w_packed, cin, cout)
    lhs = jnp.transpose(x, (1, 0, 2, 3))[None]
    y = jax.lax.conv_general_dilated(
        lhs, w_oidhw, (1, 1, 1), [(1, 2)] * 3, lhs_dilation=(2, 2, 2),
        dimension_numbers=("NCDHW", "OIDHW", "NCDHW"),
        precision=jax.lax.Precision.HIGHEST)[0]
    y = y * scale.reshape(cout, 1, 1, 1) + shift.reshape(cout, 1, 1, 1)
    return jnp.transpose(jnp.maximum(y, 0.0), (1, 0, 2, 3))


def _check_close(name, got, want, tol=3e-2):
    err = float(jnp.max(jnp.abs(got - want)))
    ref = float(jnp.max(jnp.abs(want))) + 1e-6
    assert err <= tol * ref, f"{name}: max|err|={err:.3e} vs max|ref|={ref:.3e}"


# ---------------------------------------------------------------------------
if __name__ == "__main__":
    root = jax.random.PRNGKey(0)
    k_test, k_params, k_x = jax.random.split(root, 3)
    kt = jax.random.split(k_test, 7)

    # --- small-shape checks of each Pallas kernel against pure-JAX refs ---
    x1 = jax.random.normal(kt[0], (6, 1, 6, 6), jnp.float32)        # Cin=1 (conv0)
    w1, sc1, sh1 = _init_conv(kt[1], 1, 16)
    _check_close("conv cin=1",
                 conv3d_bn_relu(x1, w1, sc1, sh1),
                 _ref_conv3d_bn_relu(x1, w1, sc1, sh1))

    x2 = jax.random.normal(kt[2], (7, 8, 7, 7), jnp.float32)
    w2, sc2, sh2 = _init_conv(kt[3], 8, 16)
    for st in (1, 2):
        _check_close(f"conv stride={st}",
                     conv3d_bn_relu(x2, w2, sc2, sh2, stride=st),
                     _ref_conv3d_bn_relu(x2, w2, sc2, sh2, stride=st))

    x3 = jax.random.normal(kt[4], (5, 8, 5, 5), jnp.float32)
    w3, sc3, sh3 = _init_conv(kt[5], 8, 16)
    _check_close("deconv s2",
                 conv_transpose3d_bn_relu_s2(x3, w3, sc3, sh3),
                 _ref_deconv_s2_bn_relu(x3, w3, sc3, sh3))

    x4 = jnp.abs(jax.random.normal(kt[6], (9, 16, 9, 9), jnp.float32))
    _check_close("maxpool",
                 maxpool3d_k3_s2(x4),
                 jax.lax.reduce_window(x4, -jnp.inf, jax.lax.max,
                                       (3, 1, 3, 3), (2, 1, 2, 2), "VALID"),
                 tol=1e-6)

    # --- full SceneNet forward ---
    # 86^3 is the smallest spatial size for which every layer (including the
    # final 3x3x3 max-pools and the stride-2 transposed-conv skip add) is valid.
    params = init_scenenet_params(k_params)
    x = jax.random.normal(k_x, (1, 1, 86, 86, 86), jnp.float32)
    out = jax.block_until_ready(scenenet_forward(params, x))
    assert out.shape == (128,), out.shape
    assert bool(jnp.all(jnp.isfinite(out)))

    print("KERNEL_OK")
</pallas_src>

<mosaic_0001>
module attributes {stable_mosaic.version = 11 : i64} {
  func.func @_conv3d_kernel(%arg0: i32, %arg1: memref<1x1x128xf32, #tpu.memory_space<vmem>>, %arg2: memref<1x1x128xf32, #tpu.memory_space<vmem>>, %arg3: memref<1x1x128xf32, #tpu.memory_space<vmem>>, %arg4: memref<9x16x3xf32, #tpu.memory_space<vmem>>, %arg5: memref<16x1xf32, #tpu.memory_space<vmem>>, %arg6: memref<16x1xf32, #tpu.memory_space<vmem>>, %arg7: memref<1x16x48xf32, #tpu.memory_space<vmem>>) attributes {dimension_semantics = [#tpu.dimension_semantics<parallel>], iteration_bounds = array<i64: 6>, scalar_prefetch = 0 : i64, scratch_operands = 0 : i64, tpu.core_type = #tpu.core_type<tc>, window_params = [{transform_indices = @transform_0, window_bounds = array<i64: 1, 1, 128>}, {transform_indices = @transform_1, window_bounds = array<i64: 1, 1, 128>}, {transform_indices = @transform_2, window_bounds = array<i64: 1, 1, 128>}, {pipeline_mode = #tpu.pipeline_mode<synchronous>, transform_indices = @transform_3, window_bounds = array<i64: 9, 16, 3>}, {pipeline_mode = #tpu.pipeline_mode<synchronous>, transform_indices = @transform_4, window_bounds = array<i64: 16, 1>}, {pipeline_mode = #tpu.pipeline_mode<synchronous>, transform_indices = @transform_5, window_bounds = array<i64: 16, 1>}, {transform_indices = @transform_6, window_bounds = array<i64: 1, 16, 48>}]} {
    %c0 = arith.constant 0 : index
    %c0_0 = arith.constant 0 : index
    %c0_1 = arith.constant 0 : index
    %0 = vector.load %arg1[%c0, %c0_0, %c0_1] : memref<1x1x128xf32, #tpu.memory_space<vmem>>, vector<1x1x48xf32>
    %1 = vector.shape_cast %0 : vector<1x1x48xf32> to vector<1x48xf32>
    %c0_2 = arith.constant 0 : index
    %c0_3 = arith.constant 0 : index
    %c1 = arith.constant 1 : index
    %2 = vector.load %arg1[%c0_2, %c0_3, %c1] : memref<1x1x128xf32, #tpu.memory_space<vmem>>, vector<1x1x48xf32>
    %3 = vector.shape_cast %2 : vector<1x1x48xf32> to vector<1x48xf32>
    %c0_4 = arith.constant 0 : index
    %c0_5 = arith.constant 0 : index
    %c2 = arith.constant 2 : index
    %4 = vector.load %arg1[%c0_4, %c0_5, %c2] : memref<1x1x128xf32, #tpu.memory_space<vmem>>, vector<1x1x48xf32>
    %5 = vector.shape_cast %4 : vector<1x1x48xf32> to vector<1x48xf32>
    %6 = tpu.concatenate %1, %3, %5 in 0 : vector<1x48xf32>, vector<1x48xf32>, vector<1x48xf32> -> vector<3x48xf32>
    %c0_6 = arith.constant 0 : index
    %c0_7 = arith.constant 0 : index
    %c0_8 = arith.constant 0 : index
    %7 = vector.load %arg4[%c0_6, %c0_7, %c0_8] : memref<9x16x3xf32, #tpu.memory_space<vmem>>, vector<1x16x3xf32>
    %8 = vector.shape_cast %7 : vector<1x16x3xf32> to vector<16x3xf32>
    %cst = arith.constant dense<0.000000e+00> : vector<16x48xf32>
    %9 = tpu.matmul %8, %6, %cst {dimension_numbers = #tpu.dot_dimension_numbers<[1], [0], [0], [1], [0, 0, 1, 1], [], []>} : vector<16x3xf32>, vector<3x48xf32>, vector<16x48xf32> -> vector<16x48xf32>
    %c0_9 = arith.constant 0 : index
    %c0_10 = arith.constant 0 : index
    %c8 = arith.constant 8 : index
    %10 = vector.load %arg1[%c0_9, %c0_10, %c8] : memref<1x1x128xf32, #tpu.memory_space<vmem>>, vector<1x1x48xf32>
    %11 = vector.shape_cast %10 : vector<1x1x48xf32> to vector<1x48xf32>
    %c0_11 = arith.constant 0 : index
    %c0_12 = arith.constant 0 : index
    %c9 = arith.constant 9 : index
    %12 = vector.load %arg1[%c0_11, %c0_12, %c9] : memref<1x1x128xf32, #tpu.memory_space<vmem>>, vector<1x1x48xf32>
    %13 = vector.shape_cast %12 : vector<1x1x48xf32> to vector<1x48xf32>
    %c0_13 = arith.constant 0 : index
    %c0_14 = arith.constant 0 : index
    %c10 = arith.constant 10 : index
    %14 = vector.load %arg1[%c0_13, %c0_14, %c10] : memref<1x1x128xf32, #tpu.memory_space<vmem>>, vector<1x1x48xf32>
    %15 = vector.shape_cast %14 : vector<1x1x48xf32> to vector<1x48xf32>
    %16 = tpu.concatenate %11, %13, %15 in 0 : vector<1x48xf32>, vector<1x48xf32>, vector<1x48xf32> -> vector<3x48xf32>
    %c1_15 = arith.constant 1 : index
    %c0_16 = arith.constant 0 : index
    %c0_17 = arith.constant 0 : index
    %17 = vector.load %arg4[%c1_15, %c0_16, %c0_17] : memref<9x16x3xf32, #tpu.memory_space<vmem>>, vector<1x16x3xf32>
    %18 = vector.shape_cast %17 : vector<1x16x3xf32> to vector<16x3xf32>
    %cst_18 = arith.constant dense<0.000000e+00> : vector<16x48xf32>
    %19 = tpu.matmul %18, %16, %cst_18 {dimension_numbers = #tpu.dot_dimension_numbers<[1], [0], [0], [1], [0, 0, 1, 1], [], []>} : vector<16x3xf32>, vector<3x48xf32>, vector<16x48xf32> -> vector<16x48xf32>
    %20 = arith.addf %9, %19 : vector<16x48xf32>
    %c0_19 = arith.constant 0 : index
    %c0_20 = arith.constant 0 : index
    %c16 = arith.constant 16 : index
    %21 = vector.load %arg1[%c0_19, %c0_20, %c16] : memref<1x1x128xf32, #tpu.memory_space<vmem>>, vector<1x1x48xf32>
    %22 = vector.shape_cast %21 : vector<1x1x48xf32> to vector<1x48xf32>
    %c0_21 = arith.constant 0 : index
    %c0_22 = arith.constant 0 : index
    %c17 = arith.constant 17 : index
    %23 = vector.load %arg1[%c0_21, %c0_22, %c17] : memref<1x1x128xf32, #tpu.memory_space<vmem>>, vector<1x1x48xf32>
    %24 = vector.shape_cast %23 : vector<1x1x48xf32> to vector<1x48xf32>
    %c0_23 = arith.constant 0 : index
    %c0_24 = arith.constant 0 : index
    %c18 = arith.constant 18 : index
    %25 = vector.load %arg1[%c0_23, %c0_24, %c18] : memref<1x1x128xf32, #tpu.memory_space<vmem>>, vector<1x1x48xf32>
    %26 = vector.shape_cast %25 : vector<1x1x48xf32> to vector<1x48xf32>
    %27 = tpu.concatenate %22, %24, %26 in 0 : vector<1x48xf32>, vector<1x48xf32>, vector<1x48xf32> -> vector<3x48xf32>
    %c2_25 = arith.constant 2 : index
    %c0_26 = arith.constant 0 : index
    %c0_27 = arith.constant 0 : index
    %28 = vector.load %arg4[%c2_25, %c0_26, %c0_27] : memref<9x16x3xf32, #tpu.memory_space<vmem>>, vector<1x16x3xf32>
    %29 = vector.shape_cast %28 : vector<1x16x3xf32> to vector<16x3xf32>
    %cst_28 = arith.constant dense<0.000000e+00> : vector<16x48xf32>
    %30 = tpu.matmul %29, %27, %cst_28 {dimension_numbers = #tpu.dot_dimension_numbers<[1], [0], [0], [1], [0, 0, 1, 1], [], []>} : vector<16x3xf32>, vector<3x48xf32>, vector<16x48xf32> -> vector<16x48xf32>
    %31 = arith.addf %20, %30 : vector<16x48xf32>
    %c0_29 = arith.constant 0 : index
    %c0_30 = arith.constant 0 : index
    %c0_31 = arith.constant 0 : index
    %32 = vector.load %arg2[%c0_29, %c0_30, %c0_31] : memref<1x1x128xf32, #tpu.memory_space<vmem>>, vector<1x1x48xf32>
    %33 = vector.shape_cast %32 : vector<1x1x48xf32> to vector<1x48xf32>
    %c0_32 = arith.constant 0 : index
    %c0_33 = arith.constant 0 : index
    %c1_34 = arith.constant 1 : index
    %34 = vector.load %arg2[%c0_32, %c0_33, %c1_34] : memref<1x1x128xf32, #tpu.memory_space<vmem>>, vector<1x1x48xf32>
    %35 = vector.shape_cast %34 : vector<1x1x48xf32> to vector<1x48xf32>
    %c0_35 = arith.constant 0 : index
    %c0_36 = arith.constant 0 : index
    %c2_37 = arith.constant 2 : index
    %36 = vector.load %arg2[%c0_35, %c0_36, %c2_37] : memref<1x1x128xf32, #tpu.memory_space<vmem>>, vector<1x1x48xf32>
    %37 = vector.shape_cast %36 : vector<1x1x48xf32> to vector<1x48xf32>
    %38 = tpu.concatenate %33, %35, %37 in 0 : vector<1x48xf32>, vector<1x48xf32>, vector<1x48xf32> -> vector<3x48xf32>
    %c3 = arith.constant 3 : index
    %c0_38 = arith.constant 0 : index
    %c0_39 = arith.constant 0 : index
    %39 = vector.load %arg4[%c3, %c0_38, %c0_39] : memref<9x16x3xf32, #tpu.memory_space<vmem>>, vector<1x16x3xf32>
    %40 = vector.shape_cast %39 : vector<1x16x3xf32> to vector<16x3xf32>
    %cst_40 = arith.constant dense<0.000000e+00> : vector<16x48xf32>
    %41 = tpu.matmul %40, %38, %cst_40 {dimension_numbers = #tpu.dot_dimension_numbers<[1], [0], [0], [1], [0, 0, 1, 1], [], []>} : vector<16x3xf32>, vector<3x48xf32>, vector<16x48xf32> -> vector<16x48xf32>
    %42 = arith.addf %31, %41 : vector<16x48xf32>
    %c0_41 = arith.constant 0 : index
    %c0_42 = arith.constant 0 : index
    %c8_43 = arith.constant 8 : index
    %43 = vector.load %arg2[%c0_41, %c0_42, %c8_43] : memref<1x1x128xf32, #tpu.memory_space<vmem>>, vector<1x1x48xf32>
    %44 = vector.shape_cast %43 : vector<1x1x48xf32> to vector<1x48xf32>
    %c0_44 = arith.constant 0 : index
    %c0_45 = arith.constant 0 : index
    %c9_46 = arith.constant 9 : index
    %45 = vector.load %arg2[%c0_44, %c0_45, %c9_46] : memref<1x1x128xf32, #tpu.memory_space<vmem>>, vector<1x1x48xf32>
    %46 = vector.shape_cast %45 : vector<1x1x48xf32> to vector<1x48xf32>
    %c0_47 = arith.constant 0 : index
    %c0_48 = arith.constant 0 : index
    %c10_49 = arith.constant 10 : index
    %47 = vector.load %arg2[%c0_47, %c0_48, %c10_49] : memref<1x1x128xf32, #tpu.memory_space<vmem>>, vector<1x1x48xf32>
    %48 = vector.shape_cast %47 : vector<1x1x48xf32> to vector<1x48xf32>
    %49 = tpu.concatenate %44, %46, %48 in 0 : vector<1x48xf32>, vector<1x48xf32>, vector<1x48xf32> -> vector<3x48xf32>
    %c4 = arith.constant 4 : index
    %c0_50 = arith.constant 0 : index
    %c0_51 = arith.constant 0 : index
    %50 = vector.load %arg4[%c4, %c0_50, %c0_51] : memref<9x16x3xf32, #tpu.memory_space<vmem>>, vector<1x16x3xf32>
    %51 = vector.shape_cast %50 : vector<1x16x3xf32> to vector<16x3xf32>
    %cst_52 = arith.constant dense<0.000000e+00> : vector<16x48xf32>
    %52 = tpu.matmul %51, %49, %cst_52 {dimension_numbers = #tpu.dot_dimension_numbers<[1], [0], [0], [1], [0, 0, 1, 1], [], []>} : vector<16x3xf32>, vector<3x48xf32>, vector<16x48xf32> -> vector<16x48xf32>
    %53 = arith.addf %42, %52 : vector<16x48xf32>
    %c0_53 = arith.constant 0 : index
    %c0_54 = arith.constant 0 : index
    %c16_55 = arith.constant 16 : index
    %54 = vector.load %arg2[%c0_53, %c0_54, %c16_55] : memref<1x1x128xf32, #tpu.memory_space<vmem>>, vector<1x1x48xf32>
    %55 = vector.shape_cast %54 : vector<1x1x48xf32> to vector<1x48xf32>
    %c0_56 = arith.constant 0 : index
    %c0_57 = arith.constant 0 : index
    %c17_58 = arith.constant 17 : index
    %56 = vector.load %arg2[%c0_56, %c0_57, %c17_58] : memref<1x1x128xf32, #tpu.memory_space<vmem>>, vector<1x1x48xf32>
    %57 = vector.shape_cast %56 : vector<1x1x48xf32> to vector<1x48xf32>
    %c0_59 = arith.constant 0 : index
    %c0_60 = arith.constant 0 : index
    %c18_61 = arith.constant 18 : index
    %58 = vector.load %arg2[%c0_59, %c0_60, %c18_61] : memref<1x1x128xf32, #tpu.memory_space<vmem>>, vector<1x1x48xf32>
    %59 = vector.shape_cast %58 : vector<1x1x48xf32> to vector<1x48xf32>
    %60 = tpu.concatenate %55, %57, %59 in 0 : vector<1x48xf32>, vector<1x48xf32>, vector<1x48xf32> -> vector<3x48xf32>
    %c5 = arith.constant 5 : index
    %c0_62 = arith.constant 0 : index
    %c0_63 = arith.constant 0 : index
    %61 = vector.load %arg4[%c5, %c0_62, %c0_63] : memref<9x16x3xf32, #tpu.memory_space<vmem>>, vector<1x16x3xf32>
    %62 = vector.shape_cast %61 : vector<1x16x3xf32> to vector<16x3xf32>
    %cst_64 = arith.constant dense<0.000000e+00> : vector<16x48xf32>
    %63 = tpu.matmul %62, %60, %cst_64 {dimension_numbers = #tpu.dot_dimension_numbers<[1], [0], [0], [1], [0, 0, 1, 1], [], []>} : vector<16x3xf32>, vector<3x48xf32>, vector<16x48xf32> -> vector<16x48xf32>
    %64 = arith.addf %53, %63 : vector<16x48xf32>
    %c0_65 = arith.constant 0 : index
    %c0_66 = arith.constant 0 : index
    %c0_67 = arith.constant 0 : index
    %65 = vector.load %arg3[%c0_65, %c0_66, %c0_67] : memref<1x1x128xf32, #tpu.memory_space<vmem>>, vector<1x1x48xf32>
    %66 = vector.shape_cast %65 : vector<1x1x48xf32> to vector<1x48xf32>
    %c0_68 = arith.constant 0 : index
    %c0_69 = arith.constant 0 : index
    %c1_70 = arith.constant 1 : index
    %67 = vector.load %arg3[%c0_68, %c0_69, %c1_70] : memref<1x1x128xf32, #tpu.memory_space<vmem>>, vector<1x1x48xf32>
    %68 = vector.shape_cast %67 : vector<1x1x48xf32> to vector<1x48xf32>
    %c0_71 = arith.constant 0 : index
    %c0_72 = arith.constant 0 : index
    %c2_73 = arith.constant 2 : index
    %69 = vector.load %arg3[%c0_71, %c0_72, %c2_73] : memref<1x1x128xf32, #tpu.memory_space<vmem>>, vector<1x1x48xf32>
    %70 = vector.shape_cast %69 : vector<1x1x48xf32> to vector<1x48xf32>
    %71 = tpu.concatenate %66, %68, %70 in 0 : vector<1x48xf32>, vector<1x48xf32>, vector<1x48xf32> -> vector<3x48xf32>
    %c6 = arith.constant 6 : index
    %c0_74 = arith.constant 0 : index
    %c0_75 = arith.constant 0 : index
    %72 = vector.load %arg4[%c6, %c0_74, %c0_75] : memref<9x16x3xf32, #tpu.memory_space<vmem>>, vector<1x16x3xf32>
    %73 = vector.shape_cast %72 : vector<1x16x3xf32> to vector<16x3xf32>
    %cst_76 = arith.constant dense<0.000000e+00> : vector<16x48xf32>
    %74 = tpu.matmul %73, %71, %cst_76 {dimension_numbers = #tpu.dot_dimension_numbers<[1], [0], [0], [1], [0, 0, 1, 1], [], []>} : vector<16x3xf32>, vector<3x48xf32>, vector<16x48xf32> -> vector<16x48xf32>
    %75 = arith.addf %64, %74 : vector<16x48xf32>
    %c0_77 = arith.constant 0 : index
    %c0_78 = arith.constant 0 : index
    %c8_79 = arith.constant 8 : index
    %76 = vector.load %arg3[%c0_77, %c0_78, %c8_79] : memref<1x1x128xf32, #tpu.memory_space<vmem>>, vector<1x1x48xf32>
    %77 = vector.shape_cast %76 : vector<1x1x48xf32> to vector<1x48xf32>
    %c0_80 = arith.constant 0 : index
    %c0_81 = arith.constant 0 : index
    %c9_82 = arith.constant 9 : index
    %78 = vector.load %arg3[%c0_80, %c0_81, %c9_82] : memref<1x1x128xf32, #tpu.memory_space<vmem>>, vector<1x1x48xf32>
    %79 = vector.shape_cast %78 : vector<1x1x48xf32> to vector<1x48xf32>
    %c0_83 = arith.constant 0 : index
    %c0_84 = arith.constant 0 : index
    %c10_85 = arith.constant 10 : index
    %80 = vector.load %arg3[%c0_83, %c0_84, %c10_85] : memref<1x1x128xf32, #tpu.memory_space<vmem>>, vector<1x1x48xf32>
    %81 = vector.shape_cast %80 : vector<1x1x48xf32> to vector<1x48xf32>
    %82 = tpu.concatenate %77, %79, %81 in 0 : vector<1x48xf32>, vector<1x48xf32>, vector<1x48xf32> -> vector<3x48xf32>
    %c7 = arith.constant 7 : index
    %c0_86 = arith.constant 0 : index
    %c0_87 = arith.constant 0 : index
    %83 = vector.load %arg4[%c7, %c0_86, %c0_87] : memref<9x16x3xf32, #tpu.memory_space<vmem>>, vector<1x16x3xf32>
    %84 = vector.shape_cast %83 : vector<1x16x3xf32> to vector<16x3xf32>
    %cst_88 = arith.constant dense<0.000000e+00> : vector<16x48xf32>
    %85 = tpu.matmul %84, %82, %cst_88 {dimension_numbers = #tpu.dot_dimension_numbers<[1], [0], [0], [1], [0, 0, 1, 1], [], []>} : vector<16x3xf32>, vector<3x48xf32>, vector<16x48xf32> -> vector<16x48xf32>
    %86 = arith.addf %75, %85 : vector<16x48xf32>
    %c0_89 = arith.constant 0 : index
    %c0_90 = arith.constant 0 : index
    %c16_91 = arith.constant 16 : index
    %87 = vector.load %arg3[%c0_89, %c0_90, %c16_91] : memref<1x1x128xf32, #tpu.memory_space<vmem>>, vector<1x1x48xf32>
    %88 = vector.shape_cast %87 : vector<1x1x48xf32> to vector<1x48xf32>
    %c0_92 = arith.constant 0 : index
    %c0_93 = arith.constant 0 : index
    %c17_94 = arith.constant 17 : index
    %89 = vector.load %arg3[%c0_92, %c0_93, %c17_94] : memref<1x1x128xf32, #tpu.memory_space<vmem>>, vector<1x1x48xf32>
    %90 = vector.shape_cast %89 : vector<1x1x48xf32> to vector<1x48xf32>
    %c0_95 = arith.constant 0 : index
    %c0_96 = arith.constant 0 : index
    %c18_97 = arith.constant 18 : index
    %91 = vector.load %arg3[%c0_95, %c0_96, %c18_97] : memref<1x1x128xf32, #tpu.memory_space<vmem>>, vector<1x1x48xf32>
    %92 = vector.shape_cast %91 : vector<1x1x48xf32> to vector<1x48xf32>
    %93 = tpu.concatenate %88, %90, %92 in 0 : vector<1x48xf32>, vector<1x48xf32>, vector<1x48xf32> -> vector<3x48xf32>
    %c8_98 = arith.constant 8 : index
    %c0_99 = arith.constant 0 : index
    %c0_100 = arith.constant 0 : index
    %94 = vector.load %arg4[%c8_98, %c0_99, %c0_100] : memref<9x16x3xf32, #tpu.memory_space<vmem>>, vector<1x16x3xf32>
    %95 = vector.shape_cast %94 : vector<1x16x3xf32> to vector<16x3xf32>
    %cst_101 = arith.constant dense<0.000000e+00> : vector<16x48xf32>
    %96 = tpu.matmul %95, %93, %cst_101 {dimension_numbers = #tpu.dot_dimension_numbers<[1], [0], [0], [1], [0, 0, 1, 1], [], []>} : vector<16x3xf32>, vector<3x48xf32>, vector<16x48xf32> -> vector<16x48xf32>
    %97 = arith.addf %86, %96 : vector<16x48xf32>
    %c0_102 = arith.constant 0 : index
    %c0_103 = arith.constant 0 : index
    %98 = vector.load %arg5[%c0_102, %c0_103] : memref<16x1xf32, #tpu.memory_space<vmem>>, vector<16x1xf32>
    %99 = vector.broadcast %98 : vector<16x1xf32> to vector<16x48xf32>
    %100 = arith.mulf %97, %99 : vector<16x48xf32>
    %c0_104 = arith.constant 0 : index
    %c0_105 = arith.constant 0 : index
    %101 = vector.load %arg6[%c0_104, %c0_105] : memref<16x1xf32, #tpu.memory_space<vmem>>, vector<16x1xf32>
    %102 = vector.broadcast %101 : vector<16x1xf32> to vector<16x48xf32>
    %103 = arith.addf %100, %102 : vector<16x48xf32>
    %cst_106 = arith.constant 0.000000e+00 : f32
    %104 = vector.broadcast %cst_106 : f32 to vector<16x48xf32>
    %105 = arith.maximumf %103, %104 : vector<16x48xf32>
    %c0_107 = arith.constant 0 : index
    %c0_108 = arith.constant 0 : index
    %c0_109 = arith.constant 0 : index
    %106 = vector.load %arg7[%c0_107, %c0_108, %c0_109] : memref<1x16x48xf32, #tpu.memory_space<vmem>>, vector<1x16x48xf32>
    %107 = vector.shape_cast %106 : vector<1x16x48xf32> to vector<16x48xf32>
    %108 = vector.shape_cast %105 : vector<16x48xf32> to vector<1x16x48xf32>
    tpu.vector_store %arg7[%c0_107, %c0_108, %c0_109], %108 {strides = array<i32>} : memref<1x16x48xf32, #tpu.memory_space<vmem>>, vector<1x16x48xf32>,
    return
  }
  func.func @transform_0(%arg0: i32) -> (i32, i32, i32) {
    %c1_i32 = arith.constant 1 : i32
    %0 = arith.muli %c1_i32, %arg0 : i32
    %c0_i32 = arith.constant 0 : i32
    %1 = arith.addi %0, %c0_i32 : i32
    %c0_i32_0 = arith.constant 0 : i32
    %c0_i32_1 = arith.constant 0 : i32
    %c0_i32_2 = arith.constant 0 : i32
    return %1, %c0_i32_0, %c0_i32_1 : i32, i32, i32
  }
  func.func @transform_1(%arg0: i32) -> (i32, i32, i32) {
    %c1_i32 = arith.constant 1 : i32
    %0 = arith.muli %c1_i32, %arg0 : i32
    %c1_i32_0 = arith.constant 1 : i32
    %1 = arith.addi %0, %c1_i32_0 : i32
    %c0_i32 = arith.constant 0 : i32
    %c0_i32_1 = arith.constant 0 : i32
    %c0_i32_2 = arith.constant 0 : i32
    return %1, %c0_i32, %c0_i32_1 : i32, i32, i32
  }
  func.func @transform_2(%arg0: i32) -> (i32, i32, i32) {
    %c1_i32 = arith.constant 1 : i32
    %0 = arith.muli %c1_i32, %arg0 : i32
    %c2_i32 = arith.constant 2 : i32
    %1 = arith.addi %0, %c2_i32 : i32
    %c0_i32 = arith.constant 0 : i32
    %c0_i32_0 = arith.constant 0 : i32
    %c0_i32_1 = arith.constant 0 : i32
    return %1, %c0_i32, %c0_i32_0 : i32, i32, i32
  }
  func.func @transform_3(%arg0: i32) -> (i32, i32, i32) {
    %c0_i32 = arith.constant 0 : i32
    %c0_i32_0 = arith.constant 0 : i32
    %c0_i32_1 = arith.constant 0 : i32
    %c0_i32_2 = arith.constant 0 : i32
    return %c0_i32, %c0_i32_0, %c0_i32_1 : i32, i32, i32
  }
  func.func @transform_4(%arg0: i32) -> (i32, i32) {
    %c0_i32 = arith.constant 0 : i32
    %c0_i32_0 = arith.constant 0 : i32
    %c0_i32_1 = arith.constant 0 : i32
    return %c0_i32, %c0_i32_0 : i32, i32
  }
  func.func @transform_5(%arg0: i32) -> (i32, i32) {
    %c0_i32 = arith.constant 0 : i32
    %c0_i32_0 = arith.constant 0 : i32
    %c0_i32_1 = arith.constant 0 : i32
    return %c0_i32, %c0_i32_0 : i32, i32
  }
  func.func @transform_6(%arg0: i32) -> (i32, i32, i32) {
    %c0_i32 = arith.constant 0 : i32
    %c0_i32_0 = arith.constant 0 : i32
    %c0_i32_1 = arith.constant 0 : i32
    return %arg0, %c0_i32, %c0_i32_0 : i32, i32, i32
  }
}

</mosaic_0001>

<llo_original>
// kernel: tpu_custom_call.1
$region0: #{tpu_custom_call.1}
  #allocation0 [shape = 'u32[]', space=smem, size = 0x4, offset = 0x4, fixed_abs, tag = 'smem constant byte address 0x4 - core index']
  #allocation1 [shape = 'u32[144,128]{1,0:T(1,128)}', space=vmem, size = 0x12000, scoped, tag = 'internal scratch']
  %s0 = inlined_call_operand.vmem [shape: f32[8,1,128], index: 0, kind: input, shape index: {}]
  %s1 = inlined_call_operand.vmem [shape: f32[8,1,128], index: 1, kind: input, shape index: {}]
  %s2 = inlined_call_operand.vmem [shape: f32[8,1,128], index: 2, kind: input, shape index: {}]
  %s3 = inlined_call_operand.vmem [shape: f32[9,16,3], index: 3, kind: input, shape index: {}]
  %s4 = inlined_call_operand.vmem [shape: f32[16,1], index: 4, kind: input, shape index: {}]
  %s5 = inlined_call_operand.vmem [shape: f32[16,1], index: 5, kind: input, shape index: {}]
  %s6 = inlined_call_operand.hbm [shape: f32[6,16,48], index: 6, kind: output, shape index: {}]
  %s7 = sld [smem:[#allocation0]]
  $region57: #{tpu_custom_call.1} parent=0
    _
  %s9 = ssub.s32 1, %s7
  %s10 = scalar_select 0, %s9, %s7
  $region1: #{tpu_custom_call.1} parent=0
    #allocation2 [shape = 'u8[16384]{0}', space=vmem, size = 0x4000, scoped, tag = 'output window, operand 0']
    #allocation3 [shape = 's32[2]{0}', space=sflag, size = 0x8, scoped, tag = 'scoped memory for tpu_custom_call.1']
    %11 = vsyncpa [#allocation3], 0
    %s12 = scalar_lea.sflag [#allocation3], 1
    %13 = vsyncpa %s12, 0
    loop: start=0, step=1, limit=8
    $region2: #{tpu_custom_call.1} parent=1 // loop_pre_header
      _
    $region3: #{tpu_custom_call.1} parent=1 // loop_header
      %s15 = sphi 0, %s19
      %p16 = scmp.ge.s32.totalorder %s15, 8
      %s25 = sphi 0, %s27
      %s28 = sphi 0, %s25
      %s29 = sphi 0, %s28
      %s45 = sphi 0, %s29
      %s53 = sphi 0, %s55
      %s56 = sphi 0, %s53
      %s57 = sphi 0, %s56
      %s73 = sphi 0, %s57
      %s81 = sphi 0, %s83
      %s84 = sphi 0, %s81
      %s85 = sphi 0, %s84
      %s101 = sphi 0, %s85
      %s105 = sphi 0, %s105
      %s107 = sphi 0, %s105
      %s108 = sphi 0, %s107
      %s122 = sphi 0, %s108
      %s126 = sphi 0, %s126
      %s128 = sphi 0, %s126
      %s129 = sphi 0, %s128
      %s143 = sphi 0, %s129
      %s147 = sphi 0, %s147
      %s149 = sphi 0, %s147
      %s150 = sphi 0, %s149
      %s164 = sphi 0, %s150
      %s170 = sphi 0, %s172
      %s173 = sphi 0, %s170
      %s174 = sphi 0, %s173
      %s190 = sphi 0, %s174
    $region4: #{tpu_custom_call.1} parent=1 // loop_header_branch
      %18 = sbr.rel (%p16) target = $region8
    $region5: #{tpu_custom_call.1} parent=1 // loop_body
      %s20 = ssub.s32 %s15, 1
      %s21 = ssub.s32 %s15, 2
      %s22 = sadd.s32 %s15, 1
      %s23 = ssub.s32 %s15, %s22
      %p24 = scmp.eq.s32.totalorder %s23, 0
      %s26 = sadd.s32 %s25, 1
      %s27 = scalar_select %p24, %s25, %s26
      %p30 = pneg %p24
      %p31 = scmp.eq.s32.totalorder %s15, 5
      %p32 = por %p30, %p31
      %p33 = scmp.ne.s32.totalorder %s25, %s28
      %p34 = scmp.eq.s32.totalorder %s15, 0
      %p35 = por %p33, %p34
      %p36 = scmp.ne.s32.totalorder %s25, %s28
      %p37 = scmp.eq.s32.totalorder %s20, 5
      %p38 = por %p36, %p37
      %p39 = scmp.ne.s32.totalorder %s28, %s29
      %p40 = scmp.eq.s32.totalorder %s20, 0
      %p41 = por %p39, %p40
      %p42 = scmp.ne.s32.totalorder %s28, %s29
      %p43 = scmp.eq.s32.totalorder %s21, 5
      %p44 = por %p42, %p43
      %p46 = scmp.ne.s32.totalorder %s29, %s45
      %p47 = scmp.eq.s32.totalorder %s21, 0
      %p48 = por %p46, %p47
      %s49 = sadd.s32 %s15, 1
      %s50 = sadd.s32 %s22, 1
      %s51 = ssub.s32 %s49, %s50
      %p52 = scmp.eq.s32.totalorder %s51, 0
      %s54 = sadd.s32 %s53, 1
      %s55 = scalar_select %p52, %s53, %s54
      %p58 = pneg %p52
      %p59 = scmp.eq.s32.totalorder %s15, 5
      %p60 = por %p58, %p59
      %p61 = scmp.ne.s32.totalorder %s53, %s56
      %p62 = scmp.eq.s32.totalorder %s15, 0
      %p63 = por %p61, %p62
      %p64 = scmp.ne.s32.totalorder %s53, %s56
      %p65 = scmp.eq.s32.totalorder %s20, 5
      %p66 = por %p64, %p65
      %p67 = scmp.ne.s32.totalorder %s56, %s57
      %p68 = scmp.eq.s32.totalorder %s20, 0
      %p69 = por %p67, %p68
      %p70 = scmp.ne.s32.totalorder %s56, %s57
      %p71 = scmp.eq.s32.totalorder %s21, 5
      %p72 = por %p70, %p71
      %p74 = scmp.ne.s32.totalorder %s57, %s73
      %p75 = scmp.eq.s32.totalorder %s21, 0
      %p76 = por %p74, %p75
      %s77 = sadd.s32 %s15, 2
      %s78 = sadd.s32 %s22, 2
      %s79 = ssub.s32 %s77, %s78
      %p80 = scmp.eq.s32.totalorder %s79, 0
      %s82 = sadd.s32 %s81, 1
      %s83 = scalar_select %p80, %s81, %s82
      %p86 = pneg %p80
      %p87 = scmp.eq.s32.totalorder %s15, 5
      %p88 = por %p86, %p87
      %p89 = scmp.ne.s32.totalorder %s81, %s84
      %p90 = scmp.eq.s32.totalorder %s15, 0
      %p91 = por %p89, %p90
      %p92 = scmp.ne.s32.totalorder %s81, %s84
      %p93 = scmp.eq.s32.totalorder %s20, 5
      %p94 = por %p92, %p93
      %p95 = scmp.ne.s32.totalorder %s84, %s85
      %p96 = scmp.eq.s32.totalorder %s20, 0
      %p97 = por %p95, %p96
      %p98 = scmp.ne.s32.totalorder %s84, %s85
      %p99 = scmp.eq.s32.totalorder %s21, 5
      %p100 = por %p98, %p99
      %p102 = scmp.ne.s32.totalorder %s85, %s101
      %p103 = scmp.eq.s32.totalorder %s21, 0
      %p104 = por %p102, %p103
      %s106 = sadd.s32 %s105, 1
      %p109 = scmp.eq.s32.totalorder %s15, 5
      %p110 = scmp.ne.s32.totalorder %s105, %s107
      %p111 = scmp.eq.s32.totalorder %s15, 0
      %p112 = por %p110, %p111
      %p113 = scmp.ne.s32.totalorder %s105, %s107
      %p114 = scmp.eq.s32.totalorder %s20, 5
      %p115 = por %p113, %p114
      %p116 = scmp.ne.s32.totalorder %s107, %s108
      %p117 = scmp.eq.s32.totalorder %s20, 0
      %p118 = por %p116, %p117
      %p119 = scmp.ne.s32.totalorder %s107, %s108
      %p120 = scmp.eq.s32.totalorder %s21, 5
      %p121 = por %p119, %p120
      %p123 = scmp.ne.s32.totalorder %s108, %s122
      %p124 = scmp.eq.s32.totalorder %s21, 0
      %p125 = por %p123, %p124
      %s127 = sadd.s32 %s126, 1
      %p130 = scmp.eq.s32.totalorder %s15, 5
      %p131 = scmp.ne.s32.totalorder %s126, %s128
      %p132 = scmp.eq.s32.totalorder %s15, 0
      %p133 = por %p131, %p132
      %p134 = scmp.ne.s32.totalorder %s126, %s128
      %p135 = scmp.eq.s32.totalorder %s20, 5
      %p136 = por %p134, %p135
      %p137 = scmp.ne.s32.totalorder %s128, %s129
      %p138 = scmp.eq.s32.totalorder %s20, 0
      %p139 = por %p137, %p138
      %p140 = scmp.ne.s32.totalorder %s128, %s129
      %p141 = scmp.eq.s32.totalorder %s21, 5
      %p142 = por %p140, %p141
      %p144 = scmp.ne.s32.totalorder %s129, %s143
      %p145 = scmp.eq.s32.totalorder %s21, 0
      %p146 = por %p144, %p145
      %s148 = sadd.s32 %s147, 1
      %p151 = scmp.eq.s32.totalorder %s15, 5
      %p152 = scmp.ne.s32.totalorder %s147, %s149
      %p153 = scmp.eq.s32.totalorder %s15, 0
      %p154 = por %p152, %p153
      %p155 = scmp.ne.s32.totalorder %s147, %s149
      %p156 = scmp.eq.s32.totalorder %s20, 5
      %p157 = por %p155, %p156
      %p158 = scmp.ne.s32.totalorder %s149, %s150
      %p159 = scmp.eq.s32.totalorder %s20, 0
      %p160 = por %p158, %p159
      %p161 = scmp.ne.s32.totalorder %s149, %s150
      %p162 = scmp.eq.s32.totalorder %s21, 5
      %p163 = por %p161, %p162
      %p165 = scmp.ne.s32.totalorder %s150, %s164
      %p166 = scmp.eq.s32.totalorder %s21, 0
      %p167 = por %p165, %p166
      %s168 = ssub.s32 %s15, %s22
      %p169 = scmp.eq.s32.totalorder %s168, 0
      %s171 = sadd.s32 %s170, 1
      %s172 = scalar_select %p169, %s170, %s171
      %p175 = pneg %p169
      %p176 = scmp.eq.s32.totalorder %s15, 5
      %p177 = por %p175, %p176
      %p178 = scmp.ne.s32.totalorder %s170, %s173
      %p179 = scmp.eq.s32.totalorder %s15, 0
      %p180 = por %p178, %p179
      %p181 = scmp.ne.s32.totalorder %s170, %s173
      %p182 = scmp.eq.s32.totalorder %s20, 5
      %p183 = por %p181, %p182
      %p184 = scmp.ne.s32.totalorder %s173, %s174
      %p185 = scmp.eq.s32.totalorder %s20, 0
      %p186 = por %p184, %p185
      %p187 = scmp.ne.s32.totalorder %s173, %s174
      %p188 = scmp.eq.s32.totalorder %s21, 5
      %p189 = por %p187, %p188
      %p191 = scmp.ne.s32.totalorder %s174, %s190
      %p192 = scmp.eq.s32.totalorder %s21, 0
      %p193 = por %p191, %p192
      %p194 = scmp.le.s32.totalorder 1, %s15
      %p195 = scmp.lt.s32.totalorder %s15, 7
      %p196 = pnand %p194, %p195
      %p197 = pneg %p196
      // Predicated region
      $region9: #{tpu_custom_call.1} parent=5 // pred_check
        _
      $region10: #{tpu_custom_call.1} parent=5 // pred_check_branch
        %199 = sbr.rel (%p196) target = $region12
      $region11: #{tpu_custom_call.1} parent=5 // pred_region
        %s200 = ssub.s32 %s15, 1
        // Predicated region
        $region13: #{tpu_custom_call.1} parent=11 // pred_check
          %p201 = pneg %p118
        $region14: #{tpu_custom_call.1} parent=11 // pred_check_branch
          %203 = sbr.rel (%p201) target = $region16
        $region15: #{tpu_custom_call.1} parent=11 // pred_region
          _
        $region16: #{tpu_custom_call.1} parent=11 // pred_fallthru
          _
        // Predicated region
        $region17: #{tpu_custom_call.1} parent=11 // pred_check
          %p204 = pneg %p139
        $region18: #{tpu_custom_call.1} parent=11 // pred_check_branch
          %206 = sbr.rel (%p204) target = $region20
        $region19: #{tpu_custom_call.1} parent=11 // pred_region
          _
        $region20: #{tpu_custom_call.1} parent=11 // pred_fallthru
          _
        // Predicated region
        $region21: #{tpu_custom_call.1} parent=11 // pred_check
          %p207 = pneg %p160
        $region22: #{tpu_custom_call.1} parent=11 // pred_check_branch
          %209 = sbr.rel (%p207) target = $region24
        $region23: #{tpu_custom_call.1} parent=11 // pred_region
          _
        $region24: #{tpu_custom_call.1} parent=11 // pred_fallthru
          _
      $region12: #{tpu_custom_call.1} parent=5 // pred_fallthru
        _
      %p210 = scmp.lt.s32.totalorder %s15, 6
      // Predicated region
      $region25: #{tpu_custom_call.1} parent=5 // pred_check
        %p211 = pneg %p210
      $region26: #{tpu_custom_call.1} parent=5 // pred_check_branch
        %213 = sbr.rel (%p211) target = $region28
      $region27: #{tpu_custom_call.1} parent=5 // pred_region
        // Predicated region
        $region29: #{tpu_custom_call.1} parent=27 // pred_check
          %p214 = pneg %p35
        $region30: #{tpu_custom_call.1} parent=27 // pred_check_branch
          %216 = sbr.rel (%p214) target = $region32
        $region31: #{tpu_custom_call.1} parent=27 // pred_region
          %p217 = scmp.lt.s32.totalorder %s15, 7
          %s218 = scalar_select %p217, %s15, 7
          %s219 = scalar_lea.vmem %s0, %s218
        $region32: #{tpu_custom_call.1} parent=27 // pred_fallthru
          _
        // Predicated region
        $region33: #{tpu_custom_call.1} parent=27 // pred_check
          %p220 = pneg %p63
        $region34: #{tpu_custom_call.1} parent=27 // pred_check_branch
          %222 = sbr.rel (%p220) target = $region36
        $region35: #{tpu_custom_call.1} parent=27 // pred_region
          %s223 = sadd.s32 %s15, 1
          %p224 = scmp.lt.s32.totalorder %s223, 7
          %s225 = scalar_select %p224, %s223, 7
          %s226 = scalar_lea.vmem %s1, %s225
          %s227 = sadd.s32 %s15, 1
        $region36: #{tpu_custom_call.1} parent=27 // pred_fallthru
          _
        // Predicated region
        $region37: #{tpu_custom_call.1} parent=27 // pred_check
          %p228 = pneg %p91
        $region38: #{tpu_custom_call.1} parent=27 // pred_check_branch
          %230 = sbr.rel (%p228) target = $region40
        $region39: #{tpu_custom_call.1} parent=27 // pred_region
          %s231 = sadd.s32 %s15, 2
          %p232 = scmp.lt.s32.totalorder %s231, 7
          %s233 = scalar_select %p232, %s231, 7
          %s234 = scalar_lea.vmem %s2, %s233
          %s235 = sadd.s32 %s15, 2
        $region40: #{tpu_custom_call.1} parent=27 // pred_fallthru
          _
      $region28: #{tpu_custom_call.1} parent=5 // pred_fallthru
        _
      %p236 = scmp.le.s32.totalorder 1, %s15
      %p237 = scmp.lt.s32.totalorder %s15, 7
      %p238 = pnand %p236, %p237
      %p239 = pneg %p238
      // Predicated region
      $region41: #{tpu_custom_call.1} parent=5 // pred_check
        _
      $region42: #{tpu_custom_call.1} parent=5 // pred_check_branch
        %241 = sbr.rel (%p238) target = $region44
      $region43: #{tpu_custom_call.1} parent=5 // pred_region
        %s242 = ssub.s32 %s15, 1
        %p243 = scmp.lt.s32.totalorder %s20, 7
        %s244 = scalar_select %p243, %s20, 7
        %s245 = scalar_lea.vmem %s0, %s244
        %p246 = pneg %p41
        %p247 = pneg %p38
        %s248 = sadd.s32 %s20, 1
        %p249 = scmp.lt.s32.totalorder %s248, 7
        %s250 = scalar_select %p249, %s248, 7
        %s251 = scalar_lea.vmem %s1, %s250
        %p252 = pneg %p69
        %p253 = pneg %p66
        %s254 = sadd.s32 %s20, 2
        %p255 = scmp.lt.s32.totalorder %s254, 7
        %s256 = scalar_select %p255, %s254, 7
        %s257 = scalar_lea.vmem %s2, %s256
        %p258 = pneg %p97
        %p259 = pneg %p94
        %p260 = pneg %p118
        %p261 = pneg %p115
        %p262 = pneg %p139
        %p263 = pneg %p136
        %p264 = pneg %p160
        %p265 = pneg %p157
        %p266 = pneg %p186
        %p267 = pneg %p183
        %s268 = sand.u32 %s173, 1
        %s269 = scalar_lea.sflag [#allocation3], %s268
        %s270 = sand.u32 %s173, 1
        %s271 = smul.addr %s270, 16
        %s272 = scalar_lea.vmem [#allocation2], %s271
        %p273 = scmp.lt.s32.totalorder %s20, 7
        %s274 = scalar_select %p273, %s20, 7
        %s275 = scalar_lea.vmem %s0, %s274
        %s276 = sadd.s32 %s20, 1
        %p277 = scmp.lt.s32.totalorder %s276, 7
        %s278 = scalar_select %p277, %s276, 7
        %s279 = scalar_lea.vmem %s1, %s278
        %s280 = sadd.s32 %s20, 1
        %s281 = sadd.s32 %s20, 2
        %p282 = scmp.lt.s32.totalorder %s281, 7
        %s283 = scalar_select %p282, %s281, 7
        %s284 = scalar_lea.vmem %s2, %s283
        %s285 = sadd.s32 %s20, 2
        %v286 = vld [vmem:[%s275] sm:$0x1]
        %v288 = vlaneseq
        %v289 = vshrl.u32 %v288, 7
        %v290 = vsub.s32 0, %v289
        %v291 = vrot.slane %v286, %v290
        %292 = vrot.lane.b32.xlu0 %v291, 127
        %v293 = vpop.permute.xlu0 %292
        %295 = vrot.lane.b32.xlu0 %v291, 126
        %v296 = vpop.permute.xlu0 %295
        %vm298 = vcmask 1040384
        %v299 = vsel %vm298, %v286, %v293
        %vm300 = vcmask 1041408
        %v301 = vsel %vm300, %v299, %v296
        %v302 = vld [vmem:[%s3] sm:$0xff]
        %v303 = vld [vmem:[%s3 + $0x8] sm:$0xff]
        %s304 = scalar_lea.vmem %s3, 16
        %v305 = vld [vmem:[%s304] sm:$0xff]
        %v306 = vld [vmem:[%s304 + $0x8] sm:$0xff]
        %308 = vrot.lane.b32.xlu0 %v301, 120
        %v309 = vpop.permute.xlu0 %308
        %vm310 = vcmask 23552
        %v312 = vsel %vm310, %v305, 0
        %v315 = vsel %vm310, %v306, 0
        %vm317 = vcmask 1042432
        %v318 = vsel %vm317, %v309, 0
        %320 = vmatprep.subr.mxu0 0.0
        %321 = vmatpush1.msra.mxu0 0.0
        %322 = vmatprep.subr.mxu0 0.0
        %323 = vmatpush1.msra.mxu0 0.0
        %324 = vmatprep.subr.mxu0 0.0
        %325 = vmatpush1.msra.mxu0 0.0
        %326 = vmatprep.subr.mxu0 0.0
        %327 = vmatpush1.msra.mxu0 0.0
        %328 = vmatprep.subr.mxu0 0.0
        %329 = vmatpush1.msra.mxu0 0.0
        %330 = vmatprep.subr.mxu0 0.0
        %331 = vmatpush1.msra.mxu0 0.0
        %332 = vmatprep.subr.mxu0 0.0
        %333 = vmatpush1.msra.mxu0 0.0
        %334 = vmatprep.subr.mxu0 0.0
        %335 = vmatpush1.msra.mxu0 0.0
        %336 = vmatprep.subr.mxu0 0.0
        %337 = vmatpush1.msra.mxu0 0.0
        %338 = vmatprep.subr.mxu0 0.0
        %339 = vmatpush1.msra.mxu0 0.0
        %340 = vmatprep.subr.mxu0 0.0
        %341 = vmatpush1.msra.mxu0 0.0
        %342 = vmatprep.subr.mxu0 0.0
        %343 = vmatpush1.msra.mxu0 0.0
        %344 = vmatprep.subr.mxu0 0.0
        %345 = vmatpush1.msra.mxu0 0.0
        %346 = vmatprep.subr.mxu0 0.0
        %347 = vmatpush1.msra.mxu0 0.0
        %348 = vmatprep.subr.mxu0 0.0
        %349 = vmatpush1.msra.mxu0 0.0
        %350 = vmatprep.subr.mxu0 0.0
        %351 = vmatpush1.msra.mxu0 %v318
        %352 = vmatprep.subr.mxu0 0.0
        %353 = vmatpush2.msra.mxu0 0.0
        %354 = vmatprep.subr.mxu0 0.0
        %355 = vmatpush2.msra.mxu0 0.0
        %356 = vmatprep.subr.mxu0 0.0
        %357 = vmatpush2.msra.mxu0 0.0
        %358 = vmatprep.subr.mxu0 0.0
        %359 = vmatpush2.msra.mxu0 0.0
        %360 = vmatprep.subr.mxu0 0.0
        %361 = vmatpush2.msra.mxu0 0.0
        %362 = vmatprep.subr.mxu0 0.0
        %363 = vmatpush2.msra.mxu0 0.0
        %364 = vmatprep.subr.mxu0 0.0
        %365 = vmatpush2.msra.mxu0 0.0
        %366 = vmatprep.subr.mxu0 0.0
        %367 = vmatpush2.msra.mxu0 0.0
        %368 = vmatprep.subr.mxu0 0.0
        %369 = vmatpush2.msra.mxu0 0.0
        %370 = vmatprep.subr.mxu0 0.0
        %371 = vmatpush2.msra.mxu0 0.0
        %372 = vmatprep.subr.mxu0 0.0
        %373 = vmatpush2.msra.mxu0 0.0
        %374 = vmatprep.subr.mxu0 0.0
        %375 = vmatpush2.msra.mxu0 0.0
        %376 = vmatprep.subr.mxu0 0.0
        %377 = vmatpush2.msra.mxu0 0.0
        %378 = vmatprep.subr.mxu0 0.0
        %379 = vmatpush2.msra.mxu0 0.0
        %380 = vmatprep.subr.mxu0 0.0
        %381 = vmatpush2.msra.mxu0 0.0
        %382 = vmatprep.subr.mxu0 0.0
        %383 = vmatpush2.msra.mxu0 0.0
        %384 = vmatprep.mubr.f32.mxu0 0.0
        %385 = vmatmul.mubr.f32.gmra.mxu0 %v312
        %v386 = vpop.f32.mrf.mxu0
        %v387 = vadd.f32 0.0, %v386
        %v388 = vpop.f32.mrf.mxu0
        %389 = vmatprep.mubr.f32.mxu0 0.0
        %390 = vmatmul.mubr.f32.gmra.mxu0 %v315
        %v391 = vpop.f32.mrf.mxu0
        %v392 = vadd.f32 0.0, %v391
        %v393 = vpop.f32.mrf.mxu0
        %394 = vdwg.mxu0
        %v396 = vsel %vm310, %v302, 0
        %v399 = vsel %vm310, %v303, 0
        %v401 = vsel %vm317, %v301, 0
        %403 = vmatprep.subr.mxu0 0.0
        %404 = vmatpush1.msra.mxu0 0.0
        %405 = vmatprep.subr.mxu0 0.0
        %406 = vmatpush1.msra.mxu0 0.0
        %407 = vmatprep.subr.mxu0 0.0
        %408 = vmatpush1.msra.mxu0 0.0
        %409 = vmatprep.subr.mxu0 0.0
        %410 = vmatpush1.msra.mxu0 0.0
        %411 = vmatprep.subr.mxu0 0.0
        %412 = vmatpush1.msra.mxu0 0.0
        %413 = vmatprep.subr.mxu0 0.0
        %414 = vmatpush1.msra.mxu0 0.0
        %415 = vmatprep.subr.mxu0 0.0
        %416 = vmatpush1.msra.mxu0 0.0
        %417 = vmatprep.subr.mxu0 0.0
        %418 = vmatpush1.msra.mxu0 0.0
        %419 = vmatprep.subr.mxu0 0.0
        %420 = vmatpush1.msra.mxu0 0.0
        %421 = vmatprep.subr.mxu0 0.0
        %422 = vmatpush1.msra.mxu0 0.0
        %423 = vmatprep.subr.mxu0 0.0
        %424 = vmatpush1.msra.mxu0 0.0
        %425 = vmatprep.subr.mxu0 0.0
        %426 = vmatpush1.msra.mxu0 0.0
        %427 = vmatprep.subr.mxu0 0.0
        %428 = vmatpush1.msra.mxu0 0.0
        %429 = vmatprep.subr.mxu0 0.0
        %430 = vmatpush1.msra.mxu0 0.0
        %431 = vmatprep.subr.mxu0 0.0
        %432 = vmatpush1.msra.mxu0 0.0
        %433 = vmatprep.subr.mxu0 0.0
        %434 = vmatpush1.msra.mxu0 %v401
        %435 = vmatprep.subr.mxu0 0.0
        %436 = vmatpush2.msra.mxu0 0.0
        %437 = vmatprep.subr.mxu0 0.0
        %438 = vmatpush2.msra.mxu0 0.0
        %439 = vmatprep.subr.mxu0 0.0
        %440 = vmatpush2.msra.mxu0 0.0
        %441 = vmatprep.subr.mxu0 0.0
        %442 = vmatpush2.msra.mxu0 0.0
        %443 = vmatprep.subr.mxu0 0.0
        %444 = vmatpush2.msra.mxu0 0.0
        %445 = vmatprep.subr.mxu0 0.0
        %446 = vmatpush2.msra.mxu0 0.0
        %447 = vmatprep.subr.mxu0 0.0
        %448 = vmatpush2.msra.mxu0 0.0
        %449 = vmatprep.subr.mxu0 0.0
        %450 = vmatpush2.msra.mxu0 0.0
        %451 = vmatprep.subr.mxu0 0.0
        %452 = vmatpush2.msra.mxu0 0.0
        %453 = vmatprep.subr.mxu0 0.0
        %454 = vmatpush2.msra.mxu0 0.0
        %455 = vmatprep.subr.mxu0 0.0
        %456 = vmatpush2.msra.mxu0 0.0
        %457 = vmatprep.subr.mxu0 0.0
        %458 = vmatpush2.msra.mxu0 0.0
        %459 = vmatprep.subr.mxu0 0.0
        %460 = vmatpush2.msra.mxu0 0.0
        %461 = vmatprep.subr.mxu0 0.0
        %462 = vmatpush2.msra.mxu0 0.0
        %463 = vmatprep.subr.mxu0 0.0
        %464 = vmatpush2.msra.mxu0 0.0
        %465 = vmatprep.subr.mxu0 0.0
        %466 = vmatpush2.msra.mxu0 0.0
        %467 = vmatprep.mubr.f32.mxu0 0.0
        %468 = vmatmul.mubr.f32.gmra.mxu0 %v396
        %v469 = vpop.f32.mrf.mxu0
        %v470 = vadd.f32 %v387, %v469
        %v471 = vpop.f32.mrf.mxu0
        %472 = vmatprep.mubr.f32.mxu0 0.0
        %473 = vmatmul.mubr.f32.gmra.mxu0 %v399
        %v474 = vpop.f32.mrf.mxu0
        %v475 = vadd.f32 %v392, %v474
        %v476 = vpop.f32.mrf.mxu0
        %477 = vdwg.mxu0
        %s478 = scalar_lea.vmem %s3, 32
        %v479 = vld [vmem:[%s478] sm:$0xff]
        %v480 = vld [vmem:[%s478 + $0x8] sm:$0xff]
        %481 = vrot.lane.b32.xlu0 %v301, 112
        %v482 = vpop.permute.xlu0 %481
        %v484 = vsel %vm310, %v479, 0
        %v487 = vsel %vm310, %v480, 0
        %v489 = vsel %vm317, %v482, 0
        %491 = vmatprep.subr.mxu0 0.0
        %492 = vmatpush1.msra.mxu0 0.0
        %493 = vmatprep.subr.mxu0 0.0
        %494 = vmatpush1.msra.mxu0 0.0
        %495 = vmatprep.subr.mxu0 0.0
        %496 = vmatpush1.msra.mxu0 0.0
        %497 = vmatprep.subr.mxu0 0.0
        %498 = vmatpush1.msra.mxu0 0.0
        %499 = vmatprep.subr.mxu0 0.0
        %500 = vmatpush1.msra.mxu0 0.0
        %501 = vmatprep.subr.mxu0 0.0
        %502 = vmatpush1.msra.mxu0 0.0
        %503 = vmatprep.subr.mxu0 0.0
        %504 = vmatpush1.msra.mxu0 0.0
        %505 = vmatprep.subr.mxu0 0.0
        %506 = vmatpush1.msra.mxu0 0.0
        %507 = vmatprep.subr.mxu0 0.0
        %508 = vmatpush1.msra.mxu0 0.0
        %509 = vmatprep.subr.mxu0 0.0
        %510 = vmatpush1.msra.mxu0 0.0
        %511 = vmatprep.subr.mxu0 0.0
        %512 = vmatpush1.msra.mxu0 0.0
        %513 = vmatprep.subr.mxu0 0.0
        %514 = vmatpush1.msra.mxu0 0.0
        %515 = vmatprep.subr.mxu0 0.0
        %516 = vmatpush1.msra.mxu0 0.0
        %517 = vmatprep.subr.mxu0 0.0
        %518 = vmatpush1.msra.mxu0 0.0
        %519 = vmatprep.subr.mxu0 0.0
        %520 = vmatpush1.msra.mxu0 0.0
        %521 = vmatprep.subr.mxu0 0.0
        %522 = vmatpush1.msra.mxu0 %v489
        %523 = vmatprep.subr.mxu0 0.0
        %524 = vmatpush2.msra.mxu0 0.0
        %525 = vmatprep.subr.mxu0 0.0
        %526 = vmatpush2.msra.mxu0 0.0
        %527 = vmatprep.subr.mxu0 0.0
        %528 = vmatpush2.msra.mxu0 0.0
        %529 = vmatprep.subr.mxu0 0.0
        %530 = vmatpush2.msra.mxu0 0.0
        %531 = vmatprep.subr.mxu0 0.0
        %532 = vmatpush2.msra.mxu0 0.0
        %533 = vmatprep.subr.mxu0 0.0
        %534 = vmatpush2.msra.mxu0 0.0
        %535 = vmatprep.subr.mxu0 0.0
        %536 = vmatpush2.msra.mxu0 0.0
        %537 = vmatprep.subr.mxu0 0.0
        %538 = vmatpush2.msra.mxu0 0.0
        %539 = vmatprep.subr.mxu0 0.0
        %540 = vmatpush2.msra.mxu0 0.0
        %541 = vmatprep.subr.mxu0 0.0
        %542 = vmatpush2.msra.mxu0 0.0
        %543 = vmatprep.subr.mxu0 0.0
        %544 = vmatpush2.msra.mxu0 0.0
        %545 = vmatprep.subr.mxu0 0.0
        %546 = vmatpush2.msra.mxu0 0.0
        %547 = vmatprep.subr.mxu0 0.0
        %548 = vmatpush2.msra.mxu0 0.0
        %549 = vmatprep.subr.mxu0 0.0
        %550 = vmatpush2.msra.mxu0 0.0
        %551 = vmatprep.subr.mxu0 0.0
        %552 = vmatpush2.msra.mxu0 0.0
        %553 = vmatprep.subr.mxu0 0.0
        %554 = vmatpush2.msra.mxu0 0.0
        %555 = vmatprep.mubr.f32.mxu0 0.0
        %556 = vmatmul.mubr.f32.gmra.mxu0 %v484
        %v557 = vpop.f32.mrf.mxu0
        %v558 = vadd.f32 0.0, %v557
        %v559 = vpop.f32.mrf.mxu0
        %560 = vmatprep.mubr.f32.mxu0 0.0
        %561 = vmatmul.mubr.f32.gmra.mxu0 %v487
        %v562 = vpop.f32.mrf.mxu0
        %v563 = vadd.f32 0.0, %v562
        %v564 = vpop.f32.mrf.mxu0
        %565 = vdwg.mxu0
        %v566 = vadd.f32 %v470, %v558
        %v567 = vadd.f32 %v475, %v563
        %v568 = vld [vmem:[%s279] sm:$0x1]
        %v570 = vlaneseq
        %v571 = vshrl.u32 %v570, 7
        %v572 = vsub.s32 0, %v571
        %v573 = vrot.slane %v568, %v572
        %574 = vrot.lane.b32.xlu0 %v573, 127
        %v575 = vpop.permute.xlu0 %574
        %577 = vrot.lane.b32.xlu0 %v573, 126
        %v578 = vpop.permute.xlu0 %577
        %v580 = vsel %vm298, %v568, %v575
        %v581 = vsel %vm300, %v580, %v578
        %s582 = scalar_lea.vmem %s3, 48
        %v583 = vld [vmem:[%s582] sm:$0xff]
        %v584 = vld [vmem:[%s582 + $0x8] sm:$0xff]
        %v586 = vsel %vm310, %v583, 0
        %v589 = vsel %vm310, %v584, 0
        %v592 = vsel %vm317, %v581, 0
        %594 = vmatprep.subr.mxu0 0.0
        %595 = vmatpush1.msra.mxu0 0.0
        %596 = vmatprep.subr.mxu0 0.0
        %597 = vmatpush1.msra.mxu0 0.0
        %598 = vmatprep.subr.mxu0 0.0
        %599 = vmatpush1.msra.mxu0 0.0
        %600 = vmatprep.subr.mxu0 0.0
        %601 = vmatpush1.msra.mxu0 0.0
        %602 = vmatprep.subr.mxu0 0.0
        %603 = vmatpush1.msra.mxu0 0.0
        %604 = vmatprep.subr.mxu0 0.0
        %605 = vmatpush1.msra.mxu0 0.0
        %606 = vmatprep.subr.mxu0 0.0
        %607 = vmatpush1.msra.mxu0 0.0
        %608 = vmatprep.subr.mxu0 0.0
        %609 = vmatpush1.msra.mxu0 0.0
        %610 = vmatprep.subr.mxu0 0.0
        %611 = vmatpush1.msra.mxu0 0.0
        %612 = vmatprep.subr.mxu0 0.0
        %613 = vmatpush1.msra.mxu0 0.0
        %614 = vmatprep.subr.mxu0 0.0
        %615 = vmatpush1.msra.mxu0 0.0
        %616 = vmatprep.subr.mxu0 0.0
        %617 = vmatpush1.msra.mxu0 0.0
        %618 = vmatprep.subr.mxu0 0.0
        %619 = vmatpush1.msra.mxu0 0.0
        %620 = vmatprep.subr.mxu0 0.0
        %621 = vmatpush1.msra.mxu0 0.0
        %622 = vmatprep.subr.mxu0 0.0
        %623 = vmatpush1.msra.mxu0 0.0
        %624 = vmatprep.subr.mxu0 0.0
        %625 = vmatpush1.msra.mxu0 %v592
        %626 = vmatprep.subr.mxu0 0.0
        %627 = vmatpush2.msra.mxu0 0.0
        %628 = vmatprep.subr.mxu0 0.0
        %629 = vmatpush2.msra.mxu0 0.0
        %630 = vmatprep.subr.mxu0 0.0
        %631 = vmatpush2.msra.mxu0 0.0
        %632 = vmatprep.subr.mxu0 0.0
        %633 = vmatpush2.msra.mxu0 0.0
        %634 = vmatprep.subr.mxu0 0.0
        %635 = vmatpush2.msra.mxu0 0.0
        %636 = vmatprep.subr.mxu0 0.0
        %637 = vmatpush2.msra.mxu0 0.0
        %638 = vmatprep.subr.mxu0 0.0
        %639 = vmatpush2.msra.mxu0 0.0
        %640 = vmatprep.subr.mxu0 0.0
        %641 = vmatpush2.msra.mxu0 0.0
        %642 = vmatprep.subr.mxu0 0.0
        %643 = vmatpush2.msra.mxu0 0.0
        %644 = vmatprep.subr.mxu0 0.0
        %645 = vmatpush2.msra.mxu0 0.0
        %646 = vmatprep.subr.mxu0 0.0
        %647 = vmatpush2.msra.mxu0 0.0
        %648 = vmatprep.subr.mxu0 0.0
        %649 = vmatpush2.msra.mxu0 0.0
        %650 = vmatprep.subr.mxu0 0.0
        %651 = vmatpush2.msra.mxu0 0.0
        %652 = vmatprep.subr.mxu0 0.0
        %653 = vmatpush2.msra.mxu0 0.0
        %654 = vmatprep.subr.mxu0 0.0
        %655 = vmatpush2.msra.mxu0 0.0
        %656 = vmatprep.subr.mxu0 0.0
        %657 = vmatpush2.msra.mxu0 0.0
        %658 = vmatprep.mubr.f32.mxu0 0.0
        %659 = vmatmul.mubr.f32.gmra.mxu0 %v586
        %v660 = vpop.f32.mrf.mxu0
        %v661 = vadd.f32 0.0, %v660
        %v662 = vpop.f32.mrf.mxu0
        %663 = vmatprep.mubr.f32.mxu0 0.0
        %664 = vmatmul.mubr.f32.gmra.mxu0 %v589
        %v665 = vpop.f32.mrf.mxu0
        %v666 = vadd.f32 0.0, %v665
        %v667 = vpop.f32.mrf.mxu0
        %668 = vdwg.mxu0
        %v669 = vadd.f32 %v566, %v661
        %v670 = vadd.f32 %v567, %v666
        %s671 = scalar_lea.vmem %s3, 64
        %v672 = vld [vmem:[%s671] sm:$0xff]
        %v673 = vld [vmem:[%s671 + $0x8] sm:$0xff]
        %674 = vrot.lane.b32.xlu0 %v581, 120
        %v675 = vpop.permute.xlu0 %674
        %v677 = vsel %vm310, %v672, 0
        %v680 = vsel %vm310, %v673, 0
        %v682 = vsel %vm317, %v675, 0
        %684 = vmatprep.subr.mxu0 0.0
        %685 = vmatpush1.msra.mxu0 0.0
        %686 = vmatprep.subr.mxu0 0.0
        %687 = vmatpush1.msra.mxu0 0.0
        %688 = vmatprep.subr.mxu0 0.0
        %689 = vmatpush1.msra.mxu0 0.0
        %690 = vmatprep.subr.mxu0 0.0
        %691 = vmatpush1.msra.mxu0 0.0
        %692 = vmatprep.subr.mxu0 0.0
        %693 = vmatpush1.msra.mxu0 0.0
        %694 = vmatprep.subr.mxu0 0.0
        %695 = vmatpush1.msra.mxu0 0.0
        %696 = vmatprep.subr.mxu0 0.0
        %697 = vmatpush1.msra.mxu0 0.0
        %698 = vmatprep.subr.mxu0 0.0
        %699 = vmatpush1.msra.mxu0 0.0
        %700 = vmatprep.subr.mxu0 0.0
        %701 = vmatpush1.msra.mxu0 0.0
        %702 = vmatprep.subr.mxu0 0.0
        %703 = vmatpush1.msra.mxu0 0.0
        %704 = vmatprep.subr.mxu0 0.0
        %705 = vmatpush1.msra.mxu0 0.0
        %706 = vmatprep.subr.mxu0 0.0
        %707 = vmatpush1.msra.mxu0 0.0
        %708 = vmatprep.subr.mxu0 0.0
        %709 = vmatpush1.msra.mxu0 0.0
        %710 = vmatprep.subr.mxu0 0.0
        %711 = vmatpush1.msra.mxu0 0.0
        %712 = vmatprep.subr.mxu0 0.0
        %713 = vmatpush1.msra.mxu0 0.0
        %714 = vmatprep.subr.mxu0 0.0
        %715 = vmatpush1.msra.mxu0 %v682
        %716 = vmatprep.subr.mxu0 0.0
        %717 = vmatpush2.msra.mxu0 0.0
        %718 = vmatprep.subr.mxu0 0.0
        %719 = vmatpush2.msra.mxu0 0.0
        %720 = vmatprep.subr.mxu0 0.0
        %721 = vmatpush2.msra.mxu0 0.0
        %722 = vmatprep.subr.mxu0 0.0
        %723 = vmatpush2.msra.mxu0 0.0
        %724 = vmatprep.subr.mxu0 0.0
        %725 = vmatpush2.msra.mxu0 0.0
        %726 = vmatprep.subr.mxu0 0.0
        %727 = vmatpush2.msra.mxu0 0.0
        %728 = vmatprep.subr.mxu0 0.0
        %729 = vmatpush2.msra.mxu0 0.0
        %730 = vmatprep.subr.mxu0 0.0
        %731 = vmatpush2.msra.mxu0 0.0
        %732 = vmatprep.subr.mxu0 0.0
        %733 = vmatpush2.msra.mxu0 0.0
        %734 = vmatprep.subr.mxu0 0.0
        %735 = vmatpush2.msra.mxu0 0.0
        %736 = vmatprep.subr.mxu0 0.0
        %737 = vmatpush2.msra.mxu0 0.0
        %738 = vmatprep.subr.mxu0 0.0
        %739 = vmatpush2.msra.mxu0 0.0
        %740 = vmatprep.subr.mxu0 0.0
        %741 = vmatpush2.msra.mxu0 0.0
        %742 = vmatprep.subr.mxu0 0.0
        %743 = vmatpush2.msra.mxu0 0.0
        %744 = vmatprep.subr.mxu0 0.0
        %745 = vmatpush2.msra.mxu0 0.0
        %746 = vmatprep.subr.mxu0 0.0
        %747 = vmatpush2.msra.mxu0 0.0
        %748 = vmatprep.mubr.f32.mxu0 0.0
        %749 = vmatmul.mubr.f32.gmra.mxu0 %v677
        %v750 = vpop.f32.mrf.mxu0
        %v751 = vadd.f32 0.0, %v750
        %v752 = vpop.f32.mrf.mxu0
        %753 = vmatprep.mubr.f32.mxu0 0.0
        %754 = vmatmul.mubr.f32.gmra.mxu0 %v680
        %v755 = vpop.f32.mrf.mxu0
        %v756 = vadd.f32 0.0, %v755
        %v757 = vpop.f32.mrf.mxu0
        %758 = vdwg.mxu0
        %v759 = vadd.f32 %v669, %v751
        %v760 = vadd.f32 %v670, %v756
        %s761 = scalar_lea.vmem %s3, 80
        %v762 = vld [vmem:[%s761] sm:$0xff]
        %v763 = vld [vmem:[%s761 + $0x8] sm:$0xff]
        %764 = vrot.lane.b32.xlu0 %v581, 112
        %v765 = vpop.permute.xlu0 %764
        %v767 = vsel %vm310, %v762, 0
        %v770 = vsel %vm310, %v763, 0
        %v772 = vsel %vm317, %v765, 0
        %774 = vmatprep.subr.mxu0 0.0
        %775 = vmatpush1.msra.mxu0 0.0
        %776 = vmatprep.subr.mxu0 0.0
        %777 = vmatpush1.msra.mxu0 0.0
        %778 = vmatprep.subr.mxu0 0.0
        %779 = vmatpush1.msra.mxu0 0.0
        %780 = vmatprep.subr.mxu0 0.0
        %781 = vmatpush1.msra.mxu0 0.0
        %782 = vmatprep.subr.mxu0 0.0
        %783 = vmatpush1.msra.mxu0 0.0
        %784 = vmatprep.subr.mxu0 0.0
        %785 = vmatpush1.msra.mxu0 0.0
        %786 = vmatprep.subr.mxu0 0.0
        %787 = vmatpush1.msra.mxu0 0.0
        %788 = vmatprep.subr.mxu0 0.0
        %789 = vmatpush1.msra.mxu0 0.0
        %790 = vmatprep.subr.mxu0 0.0
        %791 = vmatpush1.msra.mxu0 0.0
        %792 = vmatprep.subr.mxu0 0.0
        %793 = vmatpush1.msra.mxu0 0.0
        %794 = vmatprep.subr.mxu0 0.0
        %795 = vmatpush1.msra.mxu0 0.0
        %796 = vmatprep.subr.mxu0 0.0
        %797 = vmatpush1.msra.mxu0 0.0
        %798 = vmatprep.subr.mxu0 0.0
        %799 = vmatpush1.msra.mxu0 0.0
        %800 = vmatprep.subr.mxu0 0.0
        %801 = vmatpush1.msra.mxu0 0.0
        %802 = vmatprep.subr.mxu0 0.0
        %803 = vmatpush1.msra.mxu0 0.0
        %804 = vmatprep.subr.mxu0 0.0
        %805 = vmatpush1.msra.mxu0 %v772
        %806 = vmatprep.subr.mxu0 0.0
        %807 = vmatpush2.msra.mxu0 0.0
        %808 = vmatprep.subr.mxu0 0.0
        %809 = vmatpush2.msra.mxu0 0.0
        %810 = vmatprep.subr.mxu0 0.0
        %811 = vmatpush2.msra.mxu0 0.0
        %812 = vmatprep.subr.mxu0 0.0
        %813 = vmatpush2.msra.mxu0 0.0
        %814 = vmatprep.subr.mxu0 0.0
        %815 = vmatpush2.msra.mxu0 0.0
        %816 = vmatprep.subr.mxu0 0.0
        %817 = vmatpush2.msra.mxu0 0.0
        %818 = vmatprep.subr.mxu0 0.0
        %819 = vmatpush2.msra.mxu0 0.0
        %820 = vmatprep.subr.mxu0 0.0
        %821 = vmatpush2.msra.mxu0 0.0
        %822 = vmatprep.subr.mxu0 0.0
        %823 = vmatpush2.msra.mxu0 0.0
        %824 = vmatprep.subr.mxu0 0.0
        %825 = vmatpush2.msra.mxu0 0.0
        %826 = vmatprep.subr.mxu0 0.0
        %827 = vmatpush2.msra.mxu0 0.0
        %828 = vmatprep.subr.mxu0 0.0
        %829 = vmatpush2.msra.mxu0 0.0
        %830 = vmatprep.subr.mxu0 0.0
        %831 = vmatpush2.msra.mxu0 0.0
        %832 = vmatprep.subr.mxu0 0.0
        %833 = vmatpush2.msra.mxu0 0.0
        %834 = vmatprep.subr.mxu0 0.0
        %835 = vmatpush2.msra.mxu0 0.0
        %836 = vmatprep.subr.mxu0 0.0
        %837 = vmatpush2.msra.mxu0 0.0
        %838 = vmatprep.mubr.f32.mxu0 0.0
        %839 = vmatmul.mubr.f32.gmra.mxu0 %v767
        %v840 = vpop.f32.mrf.mxu0
        %v841 = vadd.f32 0.0, %v840
        %v842 = vpop.f32.mrf.mxu0
        %843 = vmatprep.mubr.f32.mxu0 0.0
        %844 = vmatmul.mubr.f32.gmra.mxu0 %v770
        %v845 = vpop.f32.mrf.mxu0
        %v846 = vadd.f32 0.0, %v845
        %v847 = vpop.f32.mrf.mxu0
        %848 = vdwg.mxu0
        %v849 = vadd.f32 %v759, %v841
        %v850 = vadd.f32 %v760, %v846
        %v851 = vld [vmem:[%s284] sm:$0x1]
        %v853 = vlaneseq
        %v854 = vshrl.u32 %v853, 7
        %v855 = vsub.s32 0, %v854
        %v856 = vrot.slane %v851, %v855
        %857 = vrot.lane.b32.xlu0 %v856, 127
        %v858 = vpop.permute.xlu0 %857
        %860 = vrot.lane.b32.xlu0 %v856, 126
        %v861 = vpop.permute.xlu0 %860
        %v863 = vsel %vm298, %v851, %v858
        %v864 = vsel %vm300, %v863, %v861
        %s865 = scalar_lea.vmem %s3, 96
        %v866 = vld [vmem:[%s865] sm:$0xff]
        %v867 = vld [vmem:[%s865 + $0x8] sm:$0xff]
        %v869 = vsel %vm310, %v866, 0
        %v872 = vsel %vm310, %v867, 0
        %v875 = vsel %vm317, %v864, 0
        %877 = vmatprep.subr.mxu0 0.0
        %878 = vmatpush1.msra.mxu0 0.0
        %879 = vmatprep.subr.mxu0 0.0
        %880 = vmatpush1.msra.mxu0 0.0
        %881 = vmatprep.subr.mxu0 0.0
        %882 = vmatpush1.msra.mxu0 0.0
        %883 = vmatprep.subr.mxu0 0.0
        %884 = vmatpush1.msra.mxu0 0.0
        %885 = vmatprep.subr.mxu0 0.0
        %886 = vmatpush1.msra.mxu0 0.0
        %887 = vmatprep.subr.mxu0 0.0
        %888 = vmatpush1.msra.mxu0 0.0
        %889 = vmatprep.subr.mxu0 0.0
        %890 = vmatpush1.msra.mxu0 0.0
        %891 = vmatprep.subr.mxu0 0.0
        %892 = vmatpush1.msra.mxu0 0.0
        %893 = vmatprep.subr.mxu0 0.0
        %894 = vmatpush1.msra.mxu0 0.0
        %895 = vmatprep.subr.mxu0 0.0
        %896 = vmatpush1.msra.mxu0 0.0
        %897 = vmatprep.subr.mxu0 0.0
        %898 = vmatpush1.msra.mxu0 0.0
        %899 = vmatprep.subr.mxu0 0.0
        %900 = vmatpush1.msra.mxu0 0.0
        %901 = vmatprep.subr.mxu0 0.0
        %902 = vmatpush1.msra.mxu0 0.0
        %903 = vmatprep.subr.mxu0 0.0
        %904 = vmatpush1.msra.mxu0 0.0
        %905 = vmatprep.subr.mxu0 0.0
        %906 = vmatpush1.msra.mxu0 0.0
        %907 = vmatprep.subr.mxu0 0.0
        %908 = vmatpush1.msra.mxu0 %v875
        %909 = vmatprep.subr.mxu0 0.0
        %910 = vmatpush2.msra.mxu0 0.0
        %911 = vmatprep.subr.mxu0 0.0
        %912 = vmatpush2.msra.mxu0 0.0
        %913 = vmatprep.subr.mxu0 0.0
        %914 = vmatpush2.msra.mxu0 0.0
        %915 = vmatprep.subr.mxu0 0.0
        %916 = vmatpush2.msra.mxu0 0.0
        %917 = vmatprep.subr.mxu0 0.0
        %918 = vmatpush2.msra.mxu0 0.0
        %919 = vmatprep.subr.mxu0 0.0
        %920 = vmatpush2.msra.mxu0 0.0
        %921 = vmatprep.subr.mxu0 0.0
        %922 = vmatpush2.msra.mxu0 0.0
        %923 = vmatprep.subr.mxu0 0.0
        %924 = vmatpush2.msra.mxu0 0.0
        %925 = vmatprep.subr.mxu0 0.0
        %926 = vmatpush2.msra.mxu0 0.0
        %927 = vmatprep.subr.mxu0 0.0
        %928 = vmatpush2.msra.mxu0 0.0
        %929 = vmatprep.subr.mxu0 0.0
        %930 = vmatpush2.msra.mxu0 0.0
        %931 = vmatprep.subr.mxu0 0.0
        %932 = vmatpush2.msra.mxu0 0.0
        %933 = vmatprep.subr.mxu0 0.0
        %934 = vmatpush2.msra.mxu0 0.0
        %935 = vmatprep.subr.mxu0 0.0
        %936 = vmatpush2.msra.mxu0 0.0
        %937 = vmatprep.subr.mxu0 0.0
        %938 = vmatpush2.msra.mxu0 0.0
        %939 = vmatprep.subr.mxu0 0.0
        %940 = vmatpush2.msra.mxu0 0.0
        %941 = vmatprep.mubr.f32.mxu0 0.0
        %942 = vmatmul.mubr.f32.gmra.mxu0 %v869
        %v943 = vpop.f32.mrf.mxu0
        %v944 = vadd.f32 0.0, %v943
        %v945 = vpop.f32.mrf.mxu0
        %946 = vmatprep.mubr.f32.mxu0 0.0
        %947 = vmatmul.mubr.f32.gmra.mxu0 %v872
        %v948 = vpop.f32.mrf.mxu0
        %v949 = vadd.f32 0.0, %v948
        %v950 = vpop.f32.mrf.mxu0
        %951 = vdwg.mxu0
        %v952 = vadd.f32 %v849, %v944
        %v953 = vadd.f32 %v850, %v949
        %s954 = scalar_lea.vmem %s3, 112
        %v955 = vld [vmem:[%s954] sm:$0xff]
        %v956 = vld [vmem:[%s954 + $0x8] sm:$0xff]
        %957 = vrot.lane.b32.xlu0 %v864, 120
        %v958 = vpop.permute.xlu0 %957
        %v960 = vsel %vm310, %v955, 0
        %v963 = vsel %vm310, %v956, 0
        %v965 = vsel %vm317, %v958, 0
        %967 = vmatprep.subr.mxu0 0.0
        %968 = vmatpush1.msra.mxu0 0.0
        %969 = vmatprep.subr.mxu0 0.0
        %970 = vmatpush1.msra.mxu0 0.0
        %971 = vmatprep.subr.mxu0 0.0
        %972 = vmatpush1.msra.mxu0 0.0
        %973 = vmatprep.subr.mxu0 0.0
        %974 = vmatpush1.msra.mxu0 0.0
        %975 = vmatprep.subr.mxu0 0.0
        %976 = vmatpush1.msra.mxu0 0.0
        %977 = vmatprep.subr.mxu0 0.0
        %978 = vmatpush1.msra.mxu0 0.0
        %979 = vmatprep.subr.mxu0 0.0
        %980 = vmatpush1.msra.mxu0 0.0
        %981 = vmatprep.subr.mxu0 0.0
        %982 = vmatpush1.msra.mxu0 0.0
        %983 = vmatprep.subr.mxu0 0.0
        %984 = vmatpush1.msra.mxu0 0.0
        %985 = vmatprep.subr.mxu0 0.0
        %986 = vmatpush1.msra.mxu0 0.0
        %987 = vmatprep.subr.mxu0 0.0
        %988 = vmatpush1.msra.mxu0 0.0
        %989 = vmatprep.subr.mxu0 0.0
        %990 = vmatpush1.msra.mxu0 0.0
        %991 = vmatprep.subr.mxu0 0.0
        %992 = vmatpush1.msra.mxu0 0.0
        %993 = vmatprep.subr.mxu0 0.0
        %994 = vmatpush1.msra.mxu0 0.0
        %995 = vmatprep.subr.mxu0 0.0
        %996 = vmatpush1.msra.mxu0 0.0
        %997 = vmatprep.subr.mxu0 0.0
        %998 = vmatpush1.msra.mxu0 %v965
        %999 = vmatprep.subr.mxu0 0.0
        %1000 = vmatpush2.msra.mxu0 0.0
        %1001 = vmatprep.subr.mxu0 0.0
        %1002 = vmatpush2.msra.mxu0 0.0
        %1003 = vmatprep.subr.mxu0 0.0
        %1004 = vmatpush2.msra.mxu0 0.0
        %1005 = vmatprep.subr.mxu0 0.0
        %1006 = vmatpush2.msra.mxu0 0.0
        %1007 = vmatprep.subr.mxu0 0.0
        %1008 = vmatpush2.msra.mxu0 0.0
        %1009 = vmatprep.subr.mxu0 0.0
        %1010 = vmatpush2.msra.mxu0 0.0
        %1011 = vmatprep.subr.mxu0 0.0
        %1012 = vmatpush2.msra.mxu0 0.0
        %1013 = vmatprep.subr.mxu0 0.0
        %1014 = vmatpush2.msra.mxu0 0.0
        %1015 = vmatprep.subr.mxu0 0.0
        %1016 = vmatpush2.msra.mxu0 0.0
        %1017 = vmatprep.subr.mxu0 0.0
        %1018 = vmatpush2.msra.mxu0 0.0
        %1019 = vmatprep.subr.mxu0 0.0
        %1020 = vmatpush2.msra.mxu0 0.0
        %1021 = vmatprep.subr.mxu0 0.0
        %1022 = vmatpush2.msra.mxu0 0.0
        %1023 = vmatprep.subr.mxu0 0.0
        %1024 = vmatpush2.msra.mxu0 0.0
        %1025 = vmatprep.subr.mxu0 0.0
        %1026 = vmatpush2.msra.mxu0 0.0
        %1027 = vmatprep.subr.mxu0 0.0
        %1028 = vmatpush2.msra.mxu0 0.0
        %1029 = vmatprep.subr.mxu0 0.0
        %1030 = vmatpush2.msra.mxu0 0.0
        %1031 = vmatprep.mubr.f32.mxu0 0.0
        %1032 = vmatmul.mubr.f32.gmra.mxu0 %v960
        %v1033 = vpop.f32.mrf.mxu0
        %v1034 = vadd.f32 0.0, %v1033
        %v1035 = vpop.f32.mrf.mxu0
        %1036 = vmatprep.mubr.f32.mxu0 0.0
        %1037 = vmatmul.mubr.f32.gmra.mxu0 %v963
        %v1038 = vpop.f32.mrf.mxu0
        %v1039 = vadd.f32 0.0, %v1038
        %v1040 = vpop.f32.mrf.mxu0
        %1041 = vdwg.mxu0
        %v1042 = vadd.f32 %v952, %v1034
        %v1043 = vadd.f32 %v953, %v1039
        %s1044 = scalar_lea.vmem %s3, 128
        %v1045 = vld [vmem:[%s1044] sm:$0xff]
        %v1046 = vld [vmem:[%s1044 + $0x8] sm:$0xff]
        %1047 = vrot.lane.b32.xlu0 %v864, 112
        %v1048 = vpop.permute.xlu0 %1047
        %v1050 = vsel %vm310, %v1045, 0
        %v1053 = vsel %vm310, %v1046, 0
        %v1055 = vsel %vm317, %v1048, 0
        %1057 = vmatprep.subr.mxu0 0.0
        %1058 = vmatpush1.msra.mxu0 0.0
        %1059 = vmatprep.subr.mxu0 0.0
        %1060 = vmatpush1.msra.mxu0 0.0
        %1061 = vmatprep.subr.mxu0 0.0
        %1062 = vmatpush1.msra.mxu0 0.0
        %1063 = vmatprep.subr.mxu0 0.0
        %1064 = vmatpush1.msra.mxu0 0.0
        %1065 = vmatprep.subr.mxu0 0.0
        %1066 = vmatpush1.msra.mxu0 0.0
        %1067 = vmatprep.subr.mxu0 0.0
        %1068 = vmatpush1.msra.mxu0 0.0
        %1069 = vmatprep.subr.mxu0 0.0
        %1070 = vmatpush1.msra.mxu0 0.0
        %1071 = vmatprep.subr.mxu0 0.0
        %1072 = vmatpush1.msra.mxu0 0.0
        %1073 = vmatprep.subr.mxu0 0.0
        %1074 = vmatpush1.msra.mxu0 0.0
        %1075 = vmatprep.subr.mxu0 0.0
        %1076 = vmatpush1.msra.mxu0 0.0
        %1077 = vmatprep.subr.mxu0 0.0
        %1078 = vmatpush1.msra.mxu0 0.0
        %1079 = vmatprep.subr.mxu0 0.0
        %1080 = vmatpush1.msra.mxu0 0.0
        %1081 = vmatprep.subr.mxu0 0.0
        %1082 = vmatpush1.msra.mxu0 0.0
        %1083 = vmatprep.subr.mxu0 0.0
        %1084 = vmatpush1.msra.mxu0 0.0
        %1085 = vmatprep.subr.mxu0 0.0
        %1086 = vmatpush1.msra.mxu0 0.0
        %1087 = vmatprep.subr.mxu0 0.0
        %1088 = vmatpush1.msra.mxu0 %v1055
        %1089 = vmatprep.subr.mxu0 0.0
        %1090 = vmatpush2.msra.mxu0 0.0
        %1091 = vmatprep.subr.mxu0 0.0
        %1092 = vmatpush2.msra.mxu0 0.0
        %1093 = vmatprep.subr.mxu0 0.0
        %1094 = vmatpush2.msra.mxu0 0.0
        %1095 = vmatprep.subr.mxu0 0.0
        %1096 = vmatpush2.msra.mxu0 0.0
        %1097 = vmatprep.subr.mxu0 0.0
        %1098 = vmatpush2.msra.mxu0 0.0
        %1099 = vmatprep.subr.mxu0 0.0
        %1100 = vmatpush2.msra.mxu0 0.0
        %1101 = vmatprep.subr.mxu0 0.0
        %1102 = vmatpush2.msra.mxu0 0.0
        %1103 = vmatprep.subr.mxu0 0.0
        %1104 = vmatpush2.msra.mxu0 0.0
        %1105 = vmatprep.subr.mxu0 0.0
        %1106 = vmatpush2.msra.mxu0 0.0
        %1107 = vmatprep.subr.mxu0 0.0
        %1108 = vmatpush2.msra.mxu0 0.0
        %1109 = vmatprep.subr.mxu0 0.0
        %1110 = vmatpush2.msra.mxu0 0.0
        %1111 = vmatprep.subr.mxu0 0.0
        %1112 = vmatpush2.msra.mxu0 0.0
        %1113 = vmatprep.subr.mxu0 0.0
        %1114 = vmatpush2.msra.mxu0 0.0
        %1115 = vmatprep.subr.mxu0 0.0
        %1116 = vmatpush2.msra.mxu0 0.0
        %1117 = vmatprep.subr.mxu0 0.0
        %1118 = vmatpush2.msra.mxu0 0.0
        %1119 = vmatprep.subr.mxu0 0.0
        %1120 = vmatpush2.msra.mxu0 0.0
        %1121 = vmatprep.mubr.f32.mxu0 0.0
        %1122 = vmatmul.mubr.f32.gmra.mxu0 %v1050
        %v1123 = vpop.f32.mrf.mxu0
        %v1124 = vadd.f32 0.0, %v1123
        %v1125 = vpop.f32.mrf.mxu0
        %1126 = vmatprep.mubr.f32.mxu0 0.0
        %1127 = vmatmul.mubr.f32.gmra.mxu0 %v1053
        %v1128 = vpop.f32.mrf.mxu0
        %v1129 = vadd.f32 0.0, %v1128
        %v1130 = vpop.f32.mrf.mxu0
        %1131 = vdwg.mxu0
        %v1132 = vadd.f32 %v1042, %v1124
        %v1133 = vadd.f32 %v1043, %v1129
        %v1134 = vld [vmem:[%s4] sm:$0xff]
        %v1135 = vld [vmem:[%s4 + $0x8] sm:$0xff]
        %1137 = vset.pattern.permute.xlu0 0
        %1138 = vperm.xlu0 %1137, %v1134
        %v1139 = vpop.permute.xlu0 %1138
        %1142 = vset.pattern.permute.xlu0 0
        %1143 = vperm.xlu0 %1142, %v1135
        %v1144 = vpop.permute.xlu0 %1143
        %v1146 = vmul.f32 %v1132, %v1139
        %v1147 = vmul.f32 %v1133, %v1144
        %v1148 = vld [vmem:[%s5] sm:$0xff]
        %v1149 = vld [vmem:[%s5 + $0x8] sm:$0xff]
        %1151 = vset.pattern.permute.xlu0 0
        %1152 = vperm.xlu0 %1151, %v1148
        %v1153 = vpop.permute.xlu0 %1152
        %1156 = vset.pattern.permute.xlu0 0
        %1157 = vperm.xlu0 %1156, %v1149
        %v1158 = vpop.permute.xlu0 %1157
        %v1160 = vadd.f32 %v1146, %v1153
        %v1161 = vadd.f32 %v1147, %v1158
        %v1162 = vmax.f32 %v1160, 0.0
        %v1163 = vmax.f32 %v1161, 0.0
        %vm1164 = vcmask 392192
        %1165 = vst.msk [vmem:[%s272] sm:$0xff] %vm1164, %v1162
        %1166 = vst.msk [vmem:[%s272 + $0x8] sm:$0xff] %vm1164, %v1163
        %s1167 = sand.u32 %s173, 1
        %s1168 = scalar_lea.sflag [#allocation3], %s1167
        %s1169 = sand.u32 %s173, 1
        %s1170 = smul.addr %s1169, 16
        %s1171 = scalar_lea.vmem [#allocation2], %s1170
        // Predicated region
        $region45: #{tpu_custom_call.1} parent=43 // pred_check
          %p1172 = pneg %p183
        $region46: #{tpu_custom_call.1} parent=43 // pred_check_branch
          %1174 = sbr.rel (%p1172) target = $region48
        $region47: #{tpu_custom_call.1} parent=43 // pred_region
          %s1176 = ssub.s32 256, 256
          %1177 = vsyncadd %s1168, %s1176
          %s1178 = smul.addr %s20, 2
          %s1179 = smul.addr %s1178, 128
          %s1180 = scalar_lea.hbm %s6, %s1179
          %s1181 = sshll.u32 %s1171, 4
          %s1182 = int_to_ptr.vmem [resolvable:$true] %s1181
          %1187 = dma.vmem_to_hbm [thread:$0]  %s1182, 256, %s1180, %s1168, 128, 128, 8
        $region48: #{tpu_custom_call.1} parent=43 // pred_fallthru
          _
      $region44: #{tpu_custom_call.1} parent=5 // pred_fallthru
        _
      %p1188 = scmp.le.s32.totalorder 2, %s15
      // Predicated region
      $region49: #{tpu_custom_call.1} parent=5 // pred_check
        %p1189 = pneg %p1188
      $region50: #{tpu_custom_call.1} parent=5 // pred_check_branch
        %1191 = sbr.rel (%p1189) target = $region52
      $region51: #{tpu_custom_call.1} parent=5 // pred_region
        %s1192 = ssub.s32 %s15, 2
        // Predicated region
        $region53: #{tpu_custom_call.1} parent=51 // pred_check
          %p1193 = pneg %p189
        $region54: #{tpu_custom_call.1} parent=51 // pred_check_branch
          %1195 = sbr.rel (%p1193) target = $region56
        $region55: #{tpu_custom_call.1} parent=51 // pred_region
          %s1196 = sand.u32 %s174, 1
          %s1197 = scalar_lea.sflag [#allocation3], %s1196
          %s1198 = sand.u32 %s174, 1
          %s1199 = smul.addr %s1198, 16
          %s1200 = scalar_lea.vmem [#allocation2], %s1199
          %1201 = dma.done %s1197, 256
        $region56: #{tpu_custom_call.1} parent=51 // pred_fallthru
          _
      $region52: #{tpu_custom_call.1} parent=5 // pred_fallthru
        _
    $region6: #{tpu_custom_call.1} parent=1 // loop_footer
      %s19 = sadd.s32 1, %s15
    $region7: #{tpu_custom_call.1} parent=1 // loop_footer_branch
      %14 = sbr.rel target = $region3
    $region8: #{tpu_custom_call.1} parent=1 // loop_exit
      _
    %1202 = vsyncpa [#allocation3], 1
    %s1203 = scalar_lea.sflag [#allocation3], 1
    %1204 = vsyncpa %s1203, 1

</llo_original>
